<compile_context>
chip_gen: v6e
topology: v6e:2x2x1
jax: 0.10.0
libtpu: 0.0.40
codegen_flags: <defaults>
</compile_context>

<pallas_src>
import functools

import jax
import jax.numpy as jnp
import numpy as np
from jax import lax
from jax.experimental import pallas as pl
from jax.experimental.pallas import tpu as pltpu


# ------------------------------- fused kernel ------------------------------- #

def _bottleneck_kernel(x_ref, w1_ref, b1_ref, wdw_ref, b2_ref, w3t_ref, b3_ref,
                       o_ref, ep_ref, *, H, W, stride, shortcut):
    """Fused inverted-residual bottleneck for one image.

    x_ref   : (1, Cin, H*W)    f32   input image, channels-first, spatial on lanes
    w1_ref  : (Cin, Ch)        bf16  expand weight  (BN scale folded)
    b1_ref  : (1, Ch)          f32   expand bias
    wdw_ref : (9, Ch)          f32   depthwise taps (BN scale folded), k = kh*3+kw
    b2_ref  : (1, Ch)          f32   depthwise bias
    w3t_ref : (Cout, Ch)       bf16  project weight, transposed (BN scale folded)
    b3_ref  : (Cout, 1)        f32   project bias
    o_ref   : (1, Cout, Ho*Wo) f32   output, channels-first (== flattened NCHW)
    ep_ref  : (H+2, W+2, Ch)   f32   VMEM scratch: zero-padded expanded activation
    """
    Ch = w1_ref.shape[1]
    Ho, Wo = H // stride, W // stride

    x_t = x_ref[0]                                        # (Cin, H*W) f32

    # ---- stage 1: 1x1 expand + bias + ReLU6  (MXU, bf16 in / f32 accumulate) ----
    x_bf = x_t.astype(jnp.bfloat16)
    e = jnp.dot(x_bf.T, w1_ref[...], preferred_element_type=jnp.float32)  # (HW, Ch)
    e = jnp.clip(e + b1_ref[...], 0.0, 6.0)

    # ---- stage 2: 3x3 depthwise conv (halo + stride handled in-kernel, VPU f32) ----
    ep_ref[...] = jnp.zeros_like(ep_ref)                  # zero halo every step
    ep_ref[1:H + 1, 1:W + 1, :] = e.reshape(H, W, Ch)     # interior
    ep = ep_ref[...]                                      # (H+2, W+2, Ch)
    wdw = wdw_ref[...]                                    # (9, Ch)
    acc = ep[0:H, 0:W, :] * wdw[0, :]                     # first tap initializes acc
    for k in range(1, 9):
        kh, kw = k // 3, k % 3
        acc = acc + ep[kh:kh + H, kw:kw + W, :] * wdw[k, :]
    if stride > 1:                                        # subsample entirely in VMEM
        acc = acc.reshape(Ho, stride, W, Ch)[:, 0]        # (Ho, W, Ch)
        acc = acc.reshape(Ho, Wo, stride, Ch)[:, :, 0]    # (Ho, Wo, Ch)
    y2 = jnp.clip(acc + b2_ref[...], 0.0, 6.0)            # bias/ReLU6 on Ho*Wo only
    y2 = y2.reshape(Ho * Wo, Ch)

    # ---- stage 3: 1x1 project + bias (+ residual); channels-first => lane-dense
    #      HBM store (spatial on lanes) and the output is already NCHW. ----
    y2_bf = y2.astype(jnp.bfloat16)
    z_t = jnp.dot(w3t_ref[...], y2_bf.T,
                  preferred_element_type=jnp.float32)     # (Cout, Ho*Wo)
    z_t = z_t + b3_ref[...]
    if shortcut:
        z_t = z_t + x_t                                   # residual, same layout
    o_ref[0] = z_t


# --------------------------------- wrapper ---------------------------------- #

def fold_params(params):
    """Fold BN scales into the conv weights; cast MXU weights to bf16."""
    Cin, Ch = params["w1"].shape
    Cout = params["w3"].shape[1]
    w1 = (params["w1"] * params["scale1"][None, :]).astype(jnp.bfloat16)
    wdw = (params["w_dw"] * params["scale2"]).reshape(9, Ch).astype(jnp.float32)
    w3t = (params["w3"] * params["scale3"][None, :]).T.astype(jnp.bfloat16)
    return dict(
        w1=w1, b1=params["bias1"].reshape(1, Ch).astype(jnp.float32),
        wdw=wdw, b2=params["bias2"].reshape(1, Ch).astype(jnp.float32),
        w3t=w3t, b3=params["bias3"].reshape(Cout, 1).astype(jnp.float32))


def bottleneck_forward(x_nchw, params, *, t, stride):
    N, Cin, H, W = x_nchw.shape
    Ch = Cin * t
    Cout = params["w3"].shape[1]
    shortcut = (stride == 1) and (Cin == Cout)
    assert H % stride == 0 and W % stride == 0
    Ho, Wo = H // stride, W // stride
    HW, M2 = H * W, Ho * Wo

    kp = fold_params(params)
    x_cf = x_nchw.reshape(N, Cin, HW).astype(jnp.float32)   # NCHW, spatial flattened

    kernel = functools.partial(_bottleneck_kernel, H=H, W=W,
                               stride=stride, shortcut=shortcut)
    out = pl.pallas_call(
        kernel,
        out_shape=jax.ShapeDtypeStruct((N, Cout, M2), jnp.float32),
        grid=(N,),
        in_specs=[
            pl.BlockSpec((1, Cin, HW), lambda n: (n, 0, 0)),
            pl.BlockSpec((Cin, Ch), lambda n: (0, 0)),
            pl.BlockSpec((1, Ch), lambda n: (0, 0)),
            pl.BlockSpec((9, Ch), lambda n: (0, 0)),
            pl.BlockSpec((1, Ch), lambda n: (0, 0)),
            pl.BlockSpec((Cout, Ch), lambda n: (0, 0)),
            pl.BlockSpec((Cout, 1), lambda n: (0, 0)),
        ],
        out_specs=pl.BlockSpec((1, Cout, M2), lambda n: (n, 0, 0)),
        scratch_shapes=[pltpu.VMEM((H + 2, W + 2, Ch), jnp.float32)],
        compiler_params=pltpu.CompilerParams(
            dimension_semantics=("parallel",),
            vmem_limit_bytes=32 * 1024 * 1024),
    )(x_cf, kp["w1"], kp["b1"], kp["wdw"], kp["b2"], kp["w3t"], kp["b3"])
    return out.reshape(N, Cout, Ho, Wo)                      # already NCHW


# ------------------------- deterministic parameters ------------------------- #

def init_params(key, Cin, Cout, t):
    Ch = Cin * t
    eps = 1e-5
    ks = jax.random.split(key, 6)

    def folded_bn_stats(k4, C):
        kg, kb, km, kv = jax.random.split(k4, 4)
        gamma = jax.random.uniform(kg, (C,), minval=0.5, maxval=1.5)
        beta = 0.1 * jax.random.normal(kb, (C,))
        mean = 0.05 * jax.random.normal(km, (C,))
        var = jax.random.uniform(kv, (C,), minval=0.5, maxval=1.5)
        scale = gamma / jnp.sqrt(var + eps)
        bias = beta - mean * scale
        return scale.astype(jnp.float32), bias.astype(jnp.float32)

    w1 = (0.1 * jax.random.normal(ks[0], (Cin, Ch))).astype(jnp.float32)
    scale1, bias1 = folded_bn_stats(ks[1], Ch)
    w_dw = (0.1 * jax.random.normal(ks[2], (3, 3, Ch))).astype(jnp.float32)
    scale2, bias2 = folded_bn_stats(ks[3], Ch)
    w3 = (0.1 * jax.random.normal(ks[4], (Ch, Cout))).astype(jnp.float32)
    scale3, bias3 = folded_bn_stats(ks[5], Cout)
    return dict(w1=w1, scale1=scale1, bias1=bias1,
                w_dw=w_dw, scale2=scale2, bias2=bias2,
                w3=w3, scale3=scale3, bias3=bias3)


# ------------------------------ JAX reference ------------------------------- #

def reference_forward(x_nchw, params, *, t, stride):
    N, Cin, H, W = x_nchw.shape
    Ch = Cin * t
    Cout = params["w3"].shape[1]
    shortcut = (stride == 1) and (Cin == Cout)
    x = jnp.transpose(x_nchw, (0, 2, 3, 1)).astype(jnp.float32)
    y = jnp.einsum("nhwc,cd->nhwd", x, params["w1"])
    y = jnp.clip(y * params["scale1"] + params["bias1"], 0.0, 6.0)
    dw = params["w_dw"].reshape(3, 3, 1, Ch)
    y = lax.conv_general_dilated(
        y, dw, (stride, stride), [(1, 1), (1, 1)],
        dimension_numbers=("NHWC", "HWIO", "NHWC"), feature_group_count=Ch)
    y = jnp.clip(y * params["scale2"] + params["bias2"], 0.0, 6.0)
    z = jnp.einsum("nhwc,cd->nhwd", y, params["w3"])
    z = z * params["scale3"] + params["bias3"]
    if shortcut:
        z = z + x
    return jnp.transpose(z, (0, 3, 1, 2))


# ---------------------------------- main ------------------------------------ #

if __name__ == "__main__":
    key = jax.random.PRNGKey(0)
    kx, kp1, kp2 = jax.random.split(key, 3)

    N, Cin, H, W, t = 2, 4, 16, 16, 6
    x = jax.random.normal(kx, (N, Cin, H, W), dtype=jnp.float32)

    # Config A: stride=1, in==out  -> shortcut (residual) path
    params_a = init_params(kp1, Cin, Cin, t)
    out_a = bottleneck_forward(x, params_a, t=t, stride=1)
    ref_a = reference_forward(x, params_a, t=t, stride=1)

    # Config B: stride=2 (module default), out != in -> no shortcut
    params_b = init_params(kp2, Cin, 8, t)
    out_b = bottleneck_forward(x, params_b, t=t, stride=2)
    ref_b = reference_forward(x, params_b, t=t, stride=2)

    jax.block_until_ready((out_a, out_b))

    assert out_a.shape == (N, Cin, H, W), out_a.shape
    assert out_b.shape == (N, 8, H // 2, W // 2), out_b.shape
    # loose tolerance: matmuls run with bf16 MXU inputs (f32 accumulation)
    np.testing.assert_allclose(np.asarray(out_a), np.asarray(ref_a),
                               rtol=2e-2, atol=2e-2)
    np.testing.assert_allclose(np.asarray(out_b), np.asarray(ref_b),
                               rtol=2e-2, atol=2e-2)
    print("KERNEL_OK")
</pallas_src>

<mosaic_0001>
module attributes {stable_mosaic.version = 11 : i64} {
  func.func @_bottleneck_kernel(%arg0: i32, %arg1: memref<1x4x256xf32, #tpu.memory_space<vmem>>, %arg2: memref<4x24xbf16, #tpu.memory_space<vmem>>, %arg3: memref<1x24xf32, #tpu.memory_space<vmem>>, %arg4: memref<9x24xf32, #tpu.memory_space<vmem>>, %arg5: memref<1x24xf32, #tpu.memory_space<vmem>>, %arg6: memref<4x24xbf16, #tpu.memory_space<vmem>>, %arg7: memref<4x1xf32, #tpu.memory_space<vmem>>, %arg8: memref<1x4x256xf32, #tpu.memory_space<vmem>>, %arg9: memref<18x18x24xf32, #tpu.memory_space<vmem>>) attributes {dimension_semantics = [#tpu.dimension_semantics<parallel>], iteration_bounds = array<i64: 2>, scalar_prefetch = 0 : i64, scratch_operands = 1 : i64, tpu.core_type = #tpu.core_type<tc>, window_params = [{transform_indices = @transform_0, window_bounds = array<i64: 1, 4, 256>}, {pipeline_mode = #tpu.pipeline_mode<synchronous>, transform_indices = @transform_1, window_bounds = array<i64: 4, 24>}, {pipeline_mode = #tpu.pipeline_mode<synchronous>, transform_indices = @transform_2, window_bounds = array<i64: 1, 24>}, {pipeline_mode = #tpu.pipeline_mode<synchronous>, transform_indices = @transform_3, window_bounds = array<i64: 9, 24>}, {pipeline_mode = #tpu.pipeline_mode<synchronous>, transform_indices = @transform_4, window_bounds = array<i64: 1, 24>}, {pipeline_mode = #tpu.pipeline_mode<synchronous>, transform_indices = @transform_5, window_bounds = array<i64: 4, 24>}, {pipeline_mode = #tpu.pipeline_mode<synchronous>, transform_indices = @transform_6, window_bounds = array<i64: 4, 1>}, {transform_indices = @transform_7, window_bounds = array<i64: 1, 4, 256>}]} {
    %c0 = arith.constant 0 : index
    %c0_0 = arith.constant 0 : index
    %c0_1 = arith.constant 0 : index
    %0 = vector.load %arg1[%c0, %c0_0, %c0_1] : memref<1x4x256xf32, #tpu.memory_space<vmem>>, vector<1x4x256xf32>
    %1 = vector.shape_cast %0 : vector<1x4x256xf32> to vector<4x256xf32>
    %2 = arith.truncf %1 : vector<4x256xf32> to vector<4x256xbf16>
    %3 = tpu.transpose %2, [1, 0] : vector<4x256xbf16> -> vector<256x4xbf16>
    %c0_2 = arith.constant 0 : index
    %c0_3 = arith.constant 0 : index
    %4 = vector.load %arg2[%c0_2, %c0_3] : memref<4x24xbf16, #tpu.memory_space<vmem>>, vector<4x24xbf16>
    %cst = arith.constant dense<0.000000e+00> : vector<256x24xf32>
    %5 = tpu.matmul %3, %4, %cst {dimension_numbers = #tpu.dot_dimension_numbers<[1], [0], [0], [1], [0, 0, 1, 1], [], []>} : vector<256x4xbf16>, vector<4x24xbf16>, vector<256x24xf32> -> vector<256x24xf32>
    %c0_4 = arith.constant 0 : index
    %c0_5 = arith.constant 0 : index
    %6 = vector.load %arg3[%c0_4, %c0_5] : memref<1x24xf32, #tpu.memory_space<vmem>>, vector<1x24xf32>
    %7 = vector.broadcast %6 : vector<1x24xf32> to vector<256x24xf32>
    %8 = arith.addf %5, %7 : vector<256x24xf32>
    %cst_6 = arith.constant 0.000000e+00 : f32
    %cst_7 = arith.constant 6.000000e+00 : f32
    %9 = vector.broadcast %cst_6 : f32 to vector<256x24xf32>
    %10 = arith.maximumf %9, %8 : vector<256x24xf32>
    %11 = vector.broadcast %cst_7 : f32 to vector<256x24xf32>
    %12 = arith.minimumf %11, %10 : vector<256x24xf32>
    %cst_8 = arith.constant 0.000000e+00 : f32
    %13 = vector.broadcast %cst_8 : f32 to vector<18x18x24xf32>
    %c0_9 = arith.constant 0 : index
    %c0_10 = arith.constant 0 : index
    %c0_11 = arith.constant 0 : index
    %14 = vector.load %arg9[%c0_9, %c0_10, %c0_11] : memref<18x18x24xf32, #tpu.memory_space<vmem>>, vector<18x18x24xf32>
    tpu.vector_store %arg9[%c0_9, %c0_10, %c0_11], %13 {strides = array<i32>} : memref<18x18x24xf32, #tpu.memory_space<vmem>>, vector<18x18x24xf32>,
    %15 = vector.shape_cast %12 : vector<256x24xf32> to vector<16x16x24xf32>
    %c1 = arith.constant 1 : index
    %c1_12 = arith.constant 1 : index
    %c0_13 = arith.constant 0 : index
    %16 = vector.load %arg9[%c1, %c1_12, %c0_13] : memref<18x18x24xf32, #tpu.memory_space<vmem>>, vector<16x16x24xf32>
    tpu.vector_store %arg9[%c1, %c1_12, %c0_13], %15 {strides = array<i32>} : memref<18x18x24xf32, #tpu.memory_space<vmem>>, vector<16x16x24xf32>,
    %c0_14 = arith.constant 0 : index
    %c0_15 = arith.constant 0 : index
    %c0_16 = arith.constant 0 : index
    %17 = vector.load %arg9[%c0_14, %c0_15, %c0_16] : memref<18x18x24xf32, #tpu.memory_space<vmem>>, vector<18x18x24xf32>
    %c0_17 = arith.constant 0 : index
    %c0_18 = arith.constant 0 : index
    %18 = vector.load %arg4[%c0_17, %c0_18] : memref<9x24xf32, #tpu.memory_space<vmem>>, vector<9x24xf32>
    %19 = vector.extract_strided_slice %17 {offsets = [0, 0, 0], sizes = [16, 16, 24], strides = [1, 1, 1]} : vector<18x18x24xf32> to vector<16x16x24xf32>
    %20 = vector.extract_strided_slice %18 {offsets = [0, 0], sizes = [1, 24], strides = [1, 1]} : vector<9x24xf32> to vector<1x24xf32>
    %21 = vector.shape_cast %20 : vector<1x24xf32> to vector<24xf32>
    %22 = vector.shape_cast %21 : vector<24xf32> to vector<1x1x24xf32>
    %23 = vector.broadcast %22 : vector<1x1x24xf32> to vector<16x16x24xf32>
    %24 = arith.mulf %19, %23 : vector<16x16x24xf32>
    %25 = vector.extract_strided_slice %17 {offsets = [0, 1, 0], sizes = [16, 16, 24], strides = [1, 1, 1]} : vector<18x18x24xf32> to vector<16x16x24xf32>
    %26 = vector.extract_strided_slice %18 {offsets = [1, 0], sizes = [1, 24], strides = [1, 1]} : vector<9x24xf32> to vector<1x24xf32>
    %27 = vector.shape_cast %26 : vector<1x24xf32> to vector<24xf32>
    %28 = vector.shape_cast %27 : vector<24xf32> to vector<1x1x24xf32>
    %29 = vector.broadcast %28 : vector<1x1x24xf32> to vector<16x16x24xf32>
    %30 = arith.mulf %25, %29 : vector<16x16x24xf32>
    %31 = arith.addf %24, %30 : vector<16x16x24xf32>
    %32 = vector.extract_strided_slice %17 {offsets = [0, 2, 0], sizes = [16, 16, 24], strides = [1, 1, 1]} : vector<18x18x24xf32> to vector<16x16x24xf32>
    %33 = vector.extract_strided_slice %18 {offsets = [2, 0], sizes = [1, 24], strides = [1, 1]} : vector<9x24xf32> to vector<1x24xf32>
    %34 = vector.shape_cast %33 : vector<1x24xf32> to vector<24xf32>
    %35 = vector.shape_cast %34 : vector<24xf32> to vector<1x1x24xf32>
    %36 = vector.broadcast %35 : vector<1x1x24xf32> to vector<16x16x24xf32>
    %37 = arith.mulf %32, %36 : vector<16x16x24xf32>
    %38 = arith.addf %31, %37 : vector<16x16x24xf32>
    %39 = vector.extract_strided_slice %17 {offsets = [1, 0, 0], sizes = [16, 16, 24], strides = [1, 1, 1]} : vector<18x18x24xf32> to vector<16x16x24xf32>
    %40 = vector.extract_strided_slice %18 {offsets = [3, 0], sizes = [1, 24], strides = [1, 1]} : vector<9x24xf32> to vector<1x24xf32>
    %41 = vector.shape_cast %40 : vector<1x24xf32> to vector<24xf32>
    %42 = vector.shape_cast %41 : vector<24xf32> to vector<1x1x24xf32>
    %43 = vector.broadcast %42 : vector<1x1x24xf32> to vector<16x16x24xf32>
    %44 = arith.mulf %39, %43 : vector<16x16x24xf32>
    %45 = arith.addf %38, %44 : vector<16x16x24xf32>
    %46 = vector.extract_strided_slice %17 {offsets = [1, 1, 0], sizes = [16, 16, 24], strides = [1, 1, 1]} : vector<18x18x24xf32> to vector<16x16x24xf32>
    %47 = vector.extract_strided_slice %18 {offsets = [4, 0], sizes = [1, 24], strides = [1, 1]} : vector<9x24xf32> to vector<1x24xf32>
    %48 = vector.shape_cast %47 : vector<1x24xf32> to vector<24xf32>
    %49 = vector.shape_cast %48 : vector<24xf32> to vector<1x1x24xf32>
    %50 = vector.broadcast %49 : vector<1x1x24xf32> to vector<16x16x24xf32>
    %51 = arith.mulf %46, %50 : vector<16x16x24xf32>
    %52 = arith.addf %45, %51 : vector<16x16x24xf32>
    %53 = vector.extract_strided_slice %17 {offsets = [1, 2, 0], sizes = [16, 16, 24], strides = [1, 1, 1]} : vector<18x18x24xf32> to vector<16x16x24xf32>
    %54 = vector.extract_strided_slice %18 {offsets = [5, 0], sizes = [1, 24], strides = [1, 1]} : vector<9x24xf32> to vector<1x24xf32>
    %55 = vector.shape_cast %54 : vector<1x24xf32> to vector<24xf32>
    %56 = vector.shape_cast %55 : vector<24xf32> to vector<1x1x24xf32>
    %57 = vector.broadcast %56 : vector<1x1x24xf32> to vector<16x16x24xf32>
    %58 = arith.mulf %53, %57 : vector<16x16x24xf32>
    %59 = arith.addf %52, %58 : vector<16x16x24xf32>
    %60 = vector.extract_strided_slice %17 {offsets = [2, 0, 0], sizes = [16, 16, 24], strides = [1, 1, 1]} : vector<18x18x24xf32> to vector<16x16x24xf32>
    %61 = vector.extract_strided_slice %18 {offsets = [6, 0], sizes = [1, 24], strides = [1, 1]} : vector<9x24xf32> to vector<1x24xf32>
    %62 = vector.shape_cast %61 : vector<1x24xf32> to vector<24xf32>
    %63 = vector.shape_cast %62 : vector<24xf32> to vector<1x1x24xf32>
    %64 = vector.broadcast %63 : vector<1x1x24xf32> to vector<16x16x24xf32>
    %65 = arith.mulf %60, %64 : vector<16x16x24xf32>
    %66 = arith.addf %59, %65 : vector<16x16x24xf32>
    %67 = vector.extract_strided_slice %17 {offsets = [2, 1, 0], sizes = [16, 16, 24], strides = [1, 1, 1]} : vector<18x18x24xf32> to vector<16x16x24xf32>
    %68 = vector.extract_strided_slice %18 {offsets = [7, 0], sizes = [1, 24], strides = [1, 1]} : vector<9x24xf32> to vector<1x24xf32>
    %69 = vector.shape_cast %68 : vector<1x24xf32> to vector<24xf32>
    %70 = vector.shape_cast %69 : vector<24xf32> to vector<1x1x24xf32>
    %71 = vector.broadcast %70 : vector<1x1x24xf32> to vector<16x16x24xf32>
    %72 = arith.mulf %67, %71 : vector<16x16x24xf32>
    %73 = arith.addf %66, %72 : vector<16x16x24xf32>
    %74 = vector.extract_strided_slice %17 {offsets = [2, 2, 0], sizes = [16, 16, 24], strides = [1, 1, 1]} : vector<18x18x24xf32> to vector<16x16x24xf32>
    %75 = vector.extract_strided_slice %18 {offsets = [8, 0], sizes = [1, 24], strides = [1, 1]} : vector<9x24xf32> to vector<1x24xf32>
    %76 = vector.shape_cast %75 : vector<1x24xf32> to vector<24xf32>
    %77 = vector.shape_cast %76 : vector<24xf32> to vector<1x1x24xf32>
    %78 = vector.broadcast %77 : vector<1x1x24xf32> to vector<16x16x24xf32>
    %79 = arith.mulf %74, %78 : vector<16x16x24xf32>
    %80 = arith.addf %73, %79 : vector<16x16x24xf32>
    %c0_19 = arith.constant 0 : index
    %c0_20 = arith.constant 0 : index
    %81 = vector.load %arg5[%c0_19, %c0_20] : memref<1x24xf32, #tpu.memory_space<vmem>>, vector<1x24xf32>
    %82 = vector.shape_cast %81 : vector<1x24xf32> to vector<1x1x24xf32>
    %83 = vector.broadcast %82 : vector<1x1x24xf32> to vector<16x16x24xf32>
    %84 = arith.addf %80, %83 : vector<16x16x24xf32>
    %cst_21 = arith.constant 0.000000e+00 : f32
    %cst_22 = arith.constant 6.000000e+00 : f32
    %85 = vector.broadcast %cst_21 : f32 to vector<16x16x24xf32>
    %86 = arith.maximumf %85, %84 : vector<16x16x24xf32>
    %87 = vector.broadcast %cst_22 : f32 to vector<16x16x24xf32>
    %88 = arith.minimumf %87, %86 : vector<16x16x24xf32>
    %89 = vector.shape_cast %88 : vector<16x16x24xf32> to vector<256x24xf32>
    %90 = arith.truncf %89 : vector<256x24xf32> to vector<256x24xbf16>
    %c0_23 = arith.constant 0 : index
    %c0_24 = arith.constant 0 : index
    %91 = vector.load %arg6[%c0_23, %c0_24] : memref<4x24xbf16, #tpu.memory_space<vmem>>, vector<4x24xbf16>
    %92 = tpu.transpose %90, [1, 0] : vector<256x24xbf16> -> vector<24x256xbf16>
    %cst_25 = arith.constant dense<0.000000e+00> : vector<4x256xf32>
    %93 = tpu.matmul %91, %92, %cst_25 {dimension_numbers = #tpu.dot_dimension_numbers<[1], [0], [0], [1], [0, 0, 1, 1], [], []>} : vector<4x24xbf16>, vector<24x256xbf16>, vector<4x256xf32> -> vector<4x256xf32>
    %c0_26 = arith.constant 0 : index
    %c0_27 = arith.constant 0 : index
    %94 = vector.load %arg7[%c0_26, %c0_27] : memref<4x1xf32, #tpu.memory_space<vmem>>, vector<4x1xf32>
    %95 = vector.broadcast %94 : vector<4x1xf32> to vector<4x256xf32>
    %96 = arith.addf %93, %95 : vector<4x256xf32>
    %97 = arith.addf %96, %1 : vector<4x256xf32>
    %c0_28 = arith.constant 0 : index
    %c0_29 = arith.constant 0 : index
    %c0_30 = arith.constant 0 : index
    %98 = vector.load %arg8[%c0_28, %c0_29, %c0_30] : memref<1x4x256xf32, #tpu.memory_space<vmem>>, vector<1x4x256xf32>
    %99 = vector.shape_cast %98 : vector<1x4x256xf32> to vector<4x256xf32>
    %100 = vector.shape_cast %97 : vector<4x256xf32> to vector<1x4x256xf32>
    tpu.vector_store %arg8[%c0_28, %c0_29, %c0_30], %100 {strides = array<i32>} : memref<1x4x256xf32, #tpu.memory_space<vmem>>, vector<1x4x256xf32>,
    return
  }
  func.func @transform_0(%arg0: i32) -> (i32, i32, i32) {
    %c0_i32 = arith.constant 0 : i32
    %c0_i32_0 = arith.constant 0 : i32
    %c0_i32_1 = arith.constant 0 : i32
    return %arg0, %c0_i32, %c0_i32_0 : i32, i32, i32
  }
  func.func @transform_1(%arg0: i32) -> (i32, i32) {
    %c0_i32 = arith.constant 0 : i32
    %c0_i32_0 = arith.constant 0 : i32
    %c0_i32_1 = arith.constant 0 : i32
    return %c0_i32, %c0_i32_0 : i32, i32
  }
  func.func @transform_2(%arg0: i32) -> (i32, i32) {
    %c0_i32 = arith.constant 0 : i32
    %c0_i32_0 = arith.constant 0 : i32
    %c0_i32_1 = arith.constant 0 : i32
    return %c0_i32, %c0_i32_0 : i32, i32
  }
  func.func @transform_3(%arg0: i32) -> (i32, i32) {
    %c0_i32 = arith.constant 0 : i32
    %c0_i32_0 = arith.constant 0 : i32
    %c0_i32_1 = arith.constant 0 : i32
    return %c0_i32, %c0_i32_0 : i32, i32
  }
  func.func @transform_4(%arg0: i32) -> (i32, i32) {
    %c0_i32 = arith.constant 0 : i32
    %c0_i32_0 = arith.constant 0 : i32
    %c0_i32_1 = arith.constant 0 : i32
    return %c0_i32, %c0_i32_0 : i32, i32
  }
  func.func @transform_5(%arg0: i32) -> (i32, i32) {
    %c0_i32 = arith.constant 0 : i32
    %c0_i32_0 = arith.constant 0 : i32
    %c0_i32_1 = arith.constant 0 : i32
    return %c0_i32, %c0_i32_0 : i32, i32
  }
  func.func @transform_6(%arg0: i32) -> (i32, i32) {
    %c0_i32 = arith.constant 0 : i32
    %c0_i32_0 = arith.constant 0 : i32
    %c0_i32_1 = arith.constant 0 : i32
    return %c0_i32, %c0_i32_0 : i32, i32
  }
  func.func @transform_7(%arg0: i32) -> (i32, i32, i32) {
    %c0_i32 = arith.constant 0 : i32
    %c0_i32_0 = arith.constant 0 : i32
    %c0_i32_1 = arith.constant 0 : i32
    return %arg0, %c0_i32, %c0_i32_0 : i32, i32, i32
  }
}

</mosaic_0001>

<llo_original>
// kernel: tpu_custom_call.1
$region0: #{tpu_custom_call.1}
  #allocation0 [shape = 'u32[]', space=smem, size = 0x4, offset = 0x4, fixed_abs, tag = 'smem constant byte address 0x4 - core index']
  #allocation1 [shape = 'u32[144,128]{1,0:T(1,128)}', space=vmem, size = 0x12000, scoped, tag = 'internal scratch']
  #allocation2 [shape = 'f32[18,18,24]{2,1,0:T(8,128)}', space=vmem, size = 0x36000, scoped, tag = 'scratch operand']
  %s0 = inlined_call_operand.hbm [shape: f32[2,4,256], index: 0, kind: input, shape index: {}]
  %s1 = inlined_call_operand.vmem [shape: bf16[4,24], index: 1, kind: input, shape index: {}]
  %s2 = inlined_call_operand.vmem [shape: f32[1,24], index: 2, kind: input, shape index: {}]
  %s3 = inlined_call_operand.hbm [shape: f32[9,24], index: 3, kind: input, shape index: {}]
  %s4 = inlined_call_operand.vmem [shape: f32[1,24], index: 4, kind: input, shape index: {}]
  %s5 = inlined_call_operand.vmem [shape: bf16[4,24], index: 5, kind: input, shape index: {}]
  %s6 = inlined_call_operand.vmem [shape: f32[4,1], index: 6, kind: input, shape index: {}]
  %s7 = inlined_call_operand.hbm [shape: f32[2,4,256], index: 7, kind: output, shape index: {}]
  %s8 = sld [smem:[#allocation0]]
  $region69: #{tpu_custom_call.1} parent=0
    _
  %s10 = ssub.s32 1, %s8
  %s11 = scalar_select 0, %s10, %s8
  $region1: #{tpu_custom_call.1} parent=0
    #allocation3 [shape = 'u8[8192]{0}', space=vmem, size = 0x2000, scoped, tag = 'input window, operand 0']
    #allocation4 [shape = 's32[2]{0}', space=sflag, size = 0x8, scoped, tag = 'scoped memory for tpu_custom_call.1']
    #allocation5 [shape = 's32[2]{0}', space=sflag, size = 0x8, scoped, tag = 'scoped memory for tpu_custom_call.1']
    #allocation6 [shape = 'u8[8192]{0}', space=vmem, size = 0x2000, scoped, tag = 'input window, operand 3, single buffered']
    #allocation7 [shape = 's32[1]{0}', space=sflag, size = 0x4, scoped, tag = 'scoped memory for tpu_custom_call.1']
    #allocation8 [shape = 'u8[8192]{0}', space=vmem, size = 0x2000, scoped, tag = 'output window, operand 0']
    %12 = vsyncpa [#allocation4], 0
    %s13 = scalar_lea.sflag [#allocation4], 1
    %14 = vsyncpa %s13, 0
    %15 = vsyncpa [#allocation7], 0
    %16 = vsyncpa [#allocation5], 0
    %s17 = scalar_lea.sflag [#allocation5], 1
    %18 = vsyncpa %s17, 0
    loop: start=0, step=1, limit=4
    $region2: #{tpu_custom_call.1} parent=1 // loop_pre_header
      _
    $region3: #{tpu_custom_call.1} parent=1 // loop_header
      %s20 = sphi 0, %s24
      %p21 = scmp.ge.s32.totalorder %s20, 4
      %s30 = sphi 0, %s32
      %s33 = sphi 0, %s30
      %s34 = sphi 0, %s33
      %s50 = sphi 0, %s34
      %s54 = sphi 0, %s54
      %s56 = sphi 0, %s54
      %s57 = sphi 0, %s56
      %s71 = sphi 0, %s57
      %s75 = sphi 0, %s75
      %s77 = sphi 0, %s75
      %s78 = sphi 0, %s77
      %s92 = sphi 0, %s78
      %s96 = sphi 0, %s96
      %s98 = sphi 0, %s96
      %s99 = sphi 0, %s98
      %s113 = sphi 0, %s99
      %s117 = sphi 0, %s117
      %s119 = sphi 0, %s117
      %s120 = sphi 0, %s119
      %s134 = sphi 0, %s120
      %s138 = sphi 0, %s138
      %s140 = sphi 0, %s138
      %s141 = sphi 0, %s140
      %s155 = sphi 0, %s141
      %s159 = sphi 0, %s159
      %s161 = sphi 0, %s159
      %s162 = sphi 0, %s161
      %s176 = sphi 0, %s162
      %s182 = sphi 0, %s184
      %s185 = sphi 0, %s182
      %s186 = sphi 0, %s185
      %s202 = sphi 0, %s186
    $region4: #{tpu_custom_call.1} parent=1 // loop_header_branch
      %23 = sbr.rel (%p21) target = $region8
    $region5: #{tpu_custom_call.1} parent=1 // loop_body
      %s25 = ssub.s32 %s20, 1
      %s26 = ssub.s32 %s20, 2
      %s27 = sadd.s32 %s20, 1
      %s28 = ssub.s32 %s20, %s27
      %p29 = scmp.eq.s32.totalorder %s28, 0
      %s31 = sadd.s32 %s30, 1
      %s32 = scalar_select %p29, %s30, %s31
      %p35 = pneg %p29
      %p36 = scmp.eq.s32.totalorder %s20, 1
      %p37 = por %p35, %p36
      %p38 = scmp.ne.s32.totalorder %s30, %s33
      %p39 = scmp.eq.s32.totalorder %s20, 0
      %p40 = por %p38, %p39
      %p41 = scmp.ne.s32.totalorder %s30, %s33
      %p42 = scmp.eq.s32.totalorder %s25, 1
      %p43 = por %p41, %p42
      %p44 = scmp.ne.s32.totalorder %s33, %s34
      %p45 = scmp.eq.s32.totalorder %s25, 0
      %p46 = por %p44, %p45
      %p47 = scmp.ne.s32.totalorder %s33, %s34
      %p48 = scmp.eq.s32.totalorder %s26, 1
      %p49 = por %p47, %p48
      %p51 = scmp.ne.s32.totalorder %s34, %s50
      %p52 = scmp.eq.s32.totalorder %s26, 0
      %p53 = por %p51, %p52
      %s55 = sadd.s32 %s54, 1
      %p58 = scmp.eq.s32.totalorder %s20, 1
      %p59 = scmp.ne.s32.totalorder %s54, %s56
      %p60 = scmp.eq.s32.totalorder %s20, 0
      %p61 = por %p59, %p60
      %p62 = scmp.ne.s32.totalorder %s54, %s56
      %p63 = scmp.eq.s32.totalorder %s25, 1
      %p64 = por %p62, %p63
      %p65 = scmp.ne.s32.totalorder %s56, %s57
      %p66 = scmp.eq.s32.totalorder %s25, 0
      %p67 = por %p65, %p66
      %p68 = scmp.ne.s32.totalorder %s56, %s57
      %p69 = scmp.eq.s32.totalorder %s26, 1
      %p70 = por %p68, %p69
      %p72 = scmp.ne.s32.totalorder %s57, %s71
      %p73 = scmp.eq.s32.totalorder %s26, 0
      %p74 = por %p72, %p73
      %s76 = sadd.s32 %s75, 1
      %p79 = scmp.eq.s32.totalorder %s20, 1
      %p80 = scmp.ne.s32.totalorder %s75, %s77
      %p81 = scmp.eq.s32.totalorder %s20, 0
      %p82 = por %p80, %p81
      %p83 = scmp.ne.s32.totalorder %s75, %s77
      %p84 = scmp.eq.s32.totalorder %s25, 1
      %p85 = por %p83, %p84
      %p86 = scmp.ne.s32.totalorder %s77, %s78
      %p87 = scmp.eq.s32.totalorder %s25, 0
      %p88 = por %p86, %p87
      %p89 = scmp.ne.s32.totalorder %s77, %s78
      %p90 = scmp.eq.s32.totalorder %s26, 1
      %p91 = por %p89, %p90
      %p93 = scmp.ne.s32.totalorder %s78, %s92
      %p94 = scmp.eq.s32.totalorder %s26, 0
      %p95 = por %p93, %p94
      %s97 = sadd.s32 %s96, 1
      %p100 = scmp.eq.s32.totalorder %s20, 1
      %p101 = scmp.ne.s32.totalorder %s96, %s98
      %p102 = scmp.eq.s32.totalorder %s20, 0
      %p103 = por %p101, %p102
      %p104 = scmp.ne.s32.totalorder %s96, %s98
      %p105 = scmp.eq.s32.totalorder %s25, 1
      %p106 = por %p104, %p105
      %p107 = scmp.ne.s32.totalorder %s98, %s99
      %p108 = scmp.eq.s32.totalorder %s25, 0
      %p109 = por %p107, %p108
      %p110 = scmp.ne.s32.totalorder %s98, %s99
      %p111 = scmp.eq.s32.totalorder %s26, 1
      %p112 = por %p110, %p111
      %p114 = scmp.ne.s32.totalorder %s99, %s113
      %p115 = scmp.eq.s32.totalorder %s26, 0
      %p116 = por %p114, %p115
      %s118 = sadd.s32 %s117, 1
      %p121 = scmp.eq.s32.totalorder %s20, 1
      %p122 = scmp.ne.s32.totalorder %s117, %s119
      %p123 = scmp.eq.s32.totalorder %s20, 0
      %p124 = por %p122, %p123
      %p125 = scmp.ne.s32.totalorder %s117, %s119
      %p126 = scmp.eq.s32.totalorder %s25, 1
      %p127 = por %p125, %p126
      %p128 = scmp.ne.s32.totalorder %s119, %s120
      %p129 = scmp.eq.s32.totalorder %s25, 0
      %p130 = por %p128, %p129
      %p131 = scmp.ne.s32.totalorder %s119, %s120
      %p132 = scmp.eq.s32.totalorder %s26, 1
      %p133 = por %p131, %p132
      %p135 = scmp.ne.s32.totalorder %s120, %s134
      %p136 = scmp.eq.s32.totalorder %s26, 0
      %p137 = por %p135, %p136
      %s139 = sadd.s32 %s138, 1
      %p142 = scmp.eq.s32.totalorder %s20, 1
      %p143 = scmp.ne.s32.totalorder %s138, %s140
      %p144 = scmp.eq.s32.totalorder %s20, 0
      %p145 = por %p143, %p144
      %p146 = scmp.ne.s32.totalorder %s138, %s140
      %p147 = scmp.eq.s32.totalorder %s25, 1
      %p148 = por %p146, %p147
      %p149 = scmp.ne.s32.totalorder %s140, %s141
      %p150 = scmp.eq.s32.totalorder %s25, 0
      %p151 = por %p149, %p150
      %p152 = scmp.ne.s32.totalorder %s140, %s141
      %p153 = scmp.eq.s32.totalorder %s26, 1
      %p154 = por %p152, %p153
      %p156 = scmp.ne.s32.totalorder %s141, %s155
      %p157 = scmp.eq.s32.totalorder %s26, 0
      %p158 = por %p156, %p157
      %s160 = sadd.s32 %s159, 1
      %p163 = scmp.eq.s32.totalorder %s20, 1
      %p164 = scmp.ne.s32.totalorder %s159, %s161
      %p165 = scmp.eq.s32.totalorder %s20, 0
      %p166 = por %p164, %p165
      %p167 = scmp.ne.s32.totalorder %s159, %s161
      %p168 = scmp.eq.s32.totalorder %s25, 1
      %p169 = por %p167, %p168
      %p170 = scmp.ne.s32.totalorder %s161, %s162
      %p171 = scmp.eq.s32.totalorder %s25, 0
      %p172 = por %p170, %p171
      %p173 = scmp.ne.s32.totalorder %s161, %s162
      %p174 = scmp.eq.s32.totalorder %s26, 1
      %p175 = por %p173, %p174
      %p177 = scmp.ne.s32.totalorder %s162, %s176
      %p178 = scmp.eq.s32.totalorder %s26, 0
      %p179 = por %p177, %p178
      %s180 = ssub.s32 %s20, %s27
      %p181 = scmp.eq.s32.totalorder %s180, 0
      %s183 = sadd.s32 %s182, 1
      %s184 = scalar_select %p181, %s182, %s183
      %p187 = pneg %p181
      %p188 = scmp.eq.s32.totalorder %s20, 1
      %p189 = por %p187, %p188
      %p190 = scmp.ne.s32.totalorder %s182, %s185
      %p191 = scmp.eq.s32.totalorder %s20, 0
      %p192 = por %p190, %p191
      %p193 = scmp.ne.s32.totalorder %s182, %s185
      %p194 = scmp.eq.s32.totalorder %s25, 1
      %p195 = por %p193, %p194
      %p196 = scmp.ne.s32.totalorder %s185, %s186
      %p197 = scmp.eq.s32.totalorder %s25, 0
      %p198 = por %p196, %p197
      %p199 = scmp.ne.s32.totalorder %s185, %s186
      %p200 = scmp.eq.s32.totalorder %s26, 1
      %p201 = por %p199, %p200
      %p203 = scmp.ne.s32.totalorder %s186, %s202
      %p204 = scmp.eq.s32.totalorder %s26, 0
      %p205 = por %p203, %p204
      %p206 = scmp.le.s32.totalorder 1, %s20
      %p207 = scmp.lt.s32.totalorder %s20, 3
      %p208 = pnand %p206, %p207
      %p209 = pneg %p208
      // Predicated region
      $region9: #{tpu_custom_call.1} parent=5 // pred_check
        _
      $region10: #{tpu_custom_call.1} parent=5 // pred_check_branch
        %211 = sbr.rel (%p208) target = $region12
      $region11: #{tpu_custom_call.1} parent=5 // pred_region
        %s212 = ssub.s32 %s20, 1
        // Predicated region
        $region13: #{tpu_custom_call.1} parent=11 // pred_check
          %p213 = pneg %p67
        $region14: #{tpu_custom_call.1} parent=11 // pred_check_branch
          %215 = sbr.rel (%p213) target = $region16
        $region15: #{tpu_custom_call.1} parent=11 // pred_region
          _
        $region16: #{tpu_custom_call.1} parent=11 // pred_fallthru
          _
        // Predicated region
        $region17: #{tpu_custom_call.1} parent=11 // pred_check
          %p216 = pneg %p88
        $region18: #{tpu_custom_call.1} parent=11 // pred_check_branch
          %218 = sbr.rel (%p216) target = $region20
        $region19: #{tpu_custom_call.1} parent=11 // pred_region
          _
        $region20: #{tpu_custom_call.1} parent=11 // pred_fallthru
          _
        // Predicated region
        $region21: #{tpu_custom_call.1} parent=11 // pred_check
          %p219 = pneg %p109
        $region22: #{tpu_custom_call.1} parent=11 // pred_check_branch
          %221 = sbr.rel (%p219) target = $region24
        $region23: #{tpu_custom_call.1} parent=11 // pred_region
          %s223 = ssub.s32 256, 256
          %224 = vsyncadd [#allocation7], %s223
          %s225 = sshll.u32 [#allocation6], 4
          %s226 = int_to_ptr.vmem [resolvable:$true] %s225
          %231 = dma.hbm_to_vmem [thread:$0]  %s3, 256, %s226, [#allocation7], 128, 128, 8
        $region24: #{tpu_custom_call.1} parent=11 // pred_fallthru
          _
        // Predicated region
        $region25: #{tpu_custom_call.1} parent=11 // pred_check
          %p232 = pneg %p130
        $region26: #{tpu_custom_call.1} parent=11 // pred_check_branch
          %234 = sbr.rel (%p232) target = $region28
        $region27: #{tpu_custom_call.1} parent=11 // pred_region
          _
        $region28: #{tpu_custom_call.1} parent=11 // pred_fallthru
          _
        // Predicated region
        $region29: #{tpu_custom_call.1} parent=11 // pred_check
          %p235 = pneg %p151
        $region30: #{tpu_custom_call.1} parent=11 // pred_check_branch
          %237 = sbr.rel (%p235) target = $region32
        $region31: #{tpu_custom_call.1} parent=11 // pred_region
          _
        $region32: #{tpu_custom_call.1} parent=11 // pred_fallthru
          _
        // Predicated region
        $region33: #{tpu_custom_call.1} parent=11 // pred_check
          %p238 = pneg %p172
        $region34: #{tpu_custom_call.1} parent=11 // pred_check_branch
          %240 = sbr.rel (%p238) target = $region36
        $region35: #{tpu_custom_call.1} parent=11 // pred_region
          _
        $region36: #{tpu_custom_call.1} parent=11 // pred_fallthru
          _
      $region12: #{tpu_custom_call.1} parent=5 // pred_fallthru
        _
      %p241 = scmp.lt.s32.totalorder %s20, 2
      // Predicated region
      $region37: #{tpu_custom_call.1} parent=5 // pred_check
        %p242 = pneg %p241
      $region38: #{tpu_custom_call.1} parent=5 // pred_check_branch
        %244 = sbr.rel (%p242) target = $region40
      $region39: #{tpu_custom_call.1} parent=5 // pred_region
        // Predicated region
        $region41: #{tpu_custom_call.1} parent=39 // pred_check
          %p245 = pneg %p40
        $region42: #{tpu_custom_call.1} parent=39 // pred_check_branch
          %247 = sbr.rel (%p245) target = $region44
        $region43: #{tpu_custom_call.1} parent=39 // pred_region
          %s248 = sand.u32 %s30, 1
          %s249 = scalar_lea.sflag [#allocation4], %s248
          %s250 = sand.u32 %s30, 1
          %s251 = smul.addr %s250, 8
          %s252 = scalar_lea.vmem [#allocation3], %s251
          %s254 = ssub.s32 128, 128
          %255 = vsyncadd %s249, %s254
          %s256 = smul.addr %s20, 2
          %s257 = smul.addr %s256, 64
          %s258 = scalar_lea.hbm %s0, %s257
          %s260 = sshll.u32 %s252, 4
          %s261 = int_to_ptr.vmem [resolvable:$true] %s260
          %263 = dma.hbm_to_vmem [thread:$0]  %s258, 128, %s261, %s249
        $region44: #{tpu_custom_call.1} parent=39 // pred_fallthru
          _
      $region40: #{tpu_custom_call.1} parent=5 // pred_fallthru
        _
      %p264 = scmp.le.s32.totalorder 1, %s20
      %p265 = scmp.lt.s32.totalorder %s20, 3
      %p266 = pnand %p264, %p265
      %p267 = pneg %p266
      // Predicated region
      $region45: #{tpu_custom_call.1} parent=5 // pred_check
        _
      $region46: #{tpu_custom_call.1} parent=5 // pred_check_branch
        %269 = sbr.rel (%p266) target = $region48
      $region47: #{tpu_custom_call.1} parent=5 // pred_region
        %s270 = ssub.s32 %s20, 1
        %s271 = sand.u32 %s33, 1
        %s272 = scalar_lea.sflag [#allocation4], %s271
        %s273 = sand.u32 %s33, 1
        %s274 = smul.addr %s273, 8
        %s275 = scalar_lea.vmem [#allocation3], %s274
        // Predicated region
        $region49: #{tpu_custom_call.1} parent=47 // pred_check
          %p276 = pneg %p46
        $region50: #{tpu_custom_call.1} parent=47 // pred_check_branch
          %278 = sbr.rel (%p276) target = $region52
        $region51: #{tpu_custom_call.1} parent=47 // pred_region
          %279 = dma.done %s272, 128
        $region52: #{tpu_custom_call.1} parent=47 // pred_fallthru
          _
        // Predicated region
        $region53: #{tpu_custom_call.1} parent=47 // pred_check
          %p280 = pneg %p109
        $region54: #{tpu_custom_call.1} parent=47 // pred_check_branch
          %282 = sbr.rel (%p280) target = $region56
        $region55: #{tpu_custom_call.1} parent=47 // pred_region
          %283 = dma.done [#allocation7], 256
        $region56: #{tpu_custom_call.1} parent=47 // pred_fallthru
          _
        %s284 = sand.u32 %s33, 1
        %s285 = scalar_lea.sflag [#allocation4], %s284
        %s286 = sand.u32 %s33, 1
        %s287 = smul.addr %s286, 8
        %s288 = scalar_lea.vmem [#allocation3], %s287
        %p289 = pneg %p46
        %p290 = pneg %p43
        %p291 = pneg %p67
        %p292 = pneg %p64
        %p293 = pneg %p88
        %p294 = pneg %p85
        %p295 = pneg %p109
        %p296 = pneg %p106
        %p297 = pneg %p130
        %p298 = pneg %p127
        %p299 = pneg %p151
        %p300 = pneg %p148
        %p301 = pneg %p172
        %p302 = pneg %p169
        %p303 = pneg %p198
        %p304 = pneg %p195
        %s305 = sand.u32 %s185, 1
        %s306 = scalar_lea.sflag [#allocation5], %s305
        %s307 = sand.u32 %s185, 1
        %s308 = smul.addr %s307, 8
        %s309 = scalar_lea.vmem [#allocation8], %s308
        %v311 = vld [vmem:[%s275] sm:$0xff]
        %v313 = vcombine.high %v311, %v311
        %v315 = vpack.c.bf16 %v311, %v311
        %v316 = vpack.c.bf16 %v313, %v313
        %317 = vxpose.xlu0.c.b16.start [1/8] %v315, 128
        %318 = vxpose.xlu0.c.b16.cont [2/8] 0, 128
        %319 = vxpose.xlu0.c.b16.cont [3/8] 0, 128
        %320 = vxpose.xlu0.c.b16.cont [4/8] 0, 128
        %321 = vxpose.xlu0.c.b16.cont [5/8] 0, 128
        %322 = vxpose.xlu0.c.b16.cont [6/8] 0, 128
        %323 = vxpose.xlu0.c.b16.cont [7/8] 0, 128
        %324 = vxpose.xlu0.c.b16.end [8/8] 0, 128
        %v325 = vpop.trf.xlu0
        %v326 = vpop.trf.xlu0
        %v327 = vpop.trf.xlu0
        %v328 = vpop.trf.xlu0
        %v329 = vpop.trf.xlu0
        %v330 = vpop.trf.xlu0
        %v331 = vpop.trf.xlu0
        %v332 = vpop.trf.xlu0
        %333 = vxpose.xlu0.c.b16.start [1/8] %v316, 128
        %334 = vxpose.xlu0.c.b16.cont [2/8] 0, 128
        %335 = vxpose.xlu0.c.b16.cont [3/8] 0, 128
        %336 = vxpose.xlu0.c.b16.cont [4/8] 0, 128
        %337 = vxpose.xlu0.c.b16.cont [5/8] 0, 128
        %338 = vxpose.xlu0.c.b16.cont [6/8] 0, 128
        %339 = vxpose.xlu0.c.b16.cont [7/8] 0, 128
        %340 = vxpose.xlu0.c.b16.end [8/8] 0, 128
        %v341 = vpop.trf.xlu0
        %v342 = vpop.trf.xlu0
        %v343 = vpop.trf.xlu0
        %v344 = vpop.trf.xlu0
        %v345 = vpop.trf.xlu0
        %v346 = vpop.trf.xlu0
        %v347 = vpop.trf.xlu0
        %v348 = vpop.trf.xlu0
        %v349 = vld [vmem:[%s1] sm:$0x3]
        %v350 = vld [vmem:[%s2] sm:$0x1]
        %v352 = vlaneseq
        %v353 = vshrl.u32 %v352, 7
        %v354 = vsub.s32 0, %v353
        %v355 = vrot.slane %v350, %v354
        %vm357 = vcmask 31744
        %v359 = vsel %vm357, %v325, 0
        %v362 = vsel %vm357, %v326, 0
        %v365 = vsel %vm357, %v327, 0
        %v368 = vsel %vm357, %v328, 0
        %v371 = vsel %vm357, %v329, 0
        %v374 = vsel %vm357, %v330, 0
        %v377 = vsel %vm357, %v331, 0
        %v380 = vsel %vm357, %v332, 0
        %v383 = vsel %vm357, %v341, 0
        %v386 = vsel %vm357, %v342, 0
        %v389 = vsel %vm357, %v343, 0
        %v392 = vsel %vm357, %v344, 0
        %v395 = vsel %vm357, %v345, 0
        %v398 = vsel %vm357, %v346, 0
        %v401 = vsel %vm357, %v347, 0
        %v404 = vsel %vm357, %v348, 0
        %vm406 = vcmask 1041408
        %v408 = vsel %vm406, %v349, 0
        %410 = vmatprep.subr.bf16.mxu0 0
        %411 = vmatpush1.bf16.msra.mxu0 0
        %412 = vmatprep.subr.bf16.mxu0 0
        %413 = vmatpush1.bf16.msra.mxu0 0
        %414 = vmatprep.subr.bf16.mxu0 0
        %415 = vmatpush1.bf16.msra.mxu0 0
        %416 = vmatprep.subr.bf16.mxu0 0
        %417 = vmatpush1.bf16.msra.mxu0 0
        %418 = vmatprep.subr.bf16.mxu0 0
        %419 = vmatpush1.bf16.msra.mxu0 0
        %420 = vmatprep.subr.bf16.mxu0 0
        %421 = vmatpush1.bf16.msra.mxu0 0
        %422 = vmatprep.subr.bf16.mxu0 0
        %423 = vmatpush1.bf16.msra.mxu0 0
        %424 = vmatprep.subr.bf16.mxu0 0
        %425 = vmatpush1.bf16.msra.mxu0 %v408
        %426 = vmatprep.subr.bf16.mxu0 0
        %427 = vmatpush2.bf16.msra.mxu0 0
        %428 = vmatprep.subr.bf16.mxu0 0
        %429 = vmatpush2.bf16.msra.mxu0 0
        %430 = vmatprep.subr.bf16.mxu0 0
        %431 = vmatpush2.bf16.msra.mxu0 0
        %432 = vmatprep.subr.bf16.mxu0 0
        %433 = vmatpush2.bf16.msra.mxu0 0
        %434 = vmatprep.subr.bf16.mxu0 0
        %435 = vmatpush2.bf16.msra.mxu0 0
        %436 = vmatprep.subr.bf16.mxu0 0
        %437 = vmatpush2.bf16.msra.mxu0 0
        %438 = vmatprep.subr.bf16.mxu0 0
        %439 = vmatpush2.bf16.msra.mxu0 0
        %440 = vmatprep.subr.bf16.mxu0 0
        %441 = vmatpush2.bf16.msra.mxu0 0
        %442 = vmatprep.mubr.bf16.mxu0 0
        %443 = vmatmul.mubr.bf16.gmra.mxu0 %v359
        %v444 = vpop.f32.mrf.mxu0
        %v445 = vadd.f32 %v355, %v444
        %v446 = vpop.f32.mrf.mxu0
        %v447 = vpop.f32.mrf.mxu0
        %v448 = vadd.f32 %v355, %v447
        %v449 = vpop.f32.mrf.mxu0
        %450 = vmatprep.mubr.bf16.mxu0 0
        %451 = vmatmul.mubr.bf16.gmra.mxu0 %v362
        %v452 = vpop.f32.mrf.mxu0
        %v453 = vadd.f32 %v355, %v452
        %v454 = vpop.f32.mrf.mxu0
        %v455 = vpop.f32.mrf.mxu0
        %v456 = vadd.f32 %v355, %v455
        %v457 = vpop.f32.mrf.mxu0
        %458 = vmatprep.mubr.bf16.mxu0 0
        %459 = vmatmul.mubr.bf16.gmra.mxu0 %v365
        %v460 = vpop.f32.mrf.mxu0
        %v461 = vadd.f32 %v355, %v460
        %v462 = vpop.f32.mrf.mxu0
        %v463 = vpop.f32.mrf.mxu0
        %v464 = vadd.f32 %v355, %v463
        %v465 = vpop.f32.mrf.mxu0
        %466 = vmatprep.mubr.bf16.mxu0 0
        %467 = vmatmul.mubr.bf16.gmra.mxu0 %v368
        %v468 = vpop.f32.mrf.mxu0
        %v469 = vadd.f32 %v355, %v468
        %v470 = vpop.f32.mrf.mxu0
        %v471 = vpop.f32.mrf.mxu0
        %v472 = vadd.f32 %v355, %v471
        %v473 = vpop.f32.mrf.mxu0
        %474 = vmatprep.mubr.bf16.mxu0 0
        %475 = vmatmul.mubr.bf16.gmra.mxu0 %v371
        %v476 = vpop.f32.mrf.mxu0
        %v477 = vadd.f32 %v355, %v476
        %v478 = vpop.f32.mrf.mxu0
        %v479 = vpop.f32.mrf.mxu0
        %v480 = vadd.f32 %v355, %v479
        %v481 = vpop.f32.mrf.mxu0
        %482 = vmatprep.mubr.bf16.mxu0 0
        %483 = vmatmul.mubr.bf16.gmra.mxu0 %v374
        %v484 = vpop.f32.mrf.mxu0
        %v485 = vadd.f32 %v355, %v484
        %v486 = vpop.f32.mrf.mxu0
        %v487 = vpop.f32.mrf.mxu0
        %v488 = vadd.f32 %v355, %v487
        %v489 = vpop.f32.mrf.mxu0
        %490 = vmatprep.mubr.bf16.mxu0 0
        %491 = vmatmul.mubr.bf16.gmra.mxu0 %v377
        %v492 = vpop.f32.mrf.mxu0
        %v493 = vadd.f32 %v355, %v492
        %v494 = vpop.f32.mrf.mxu0
        %v495 = vpop.f32.mrf.mxu0
        %v496 = vadd.f32 %v355, %v495
        %v497 = vpop.f32.mrf.mxu0
        %498 = vmatprep.mubr.bf16.mxu0 0
        %499 = vmatmul.mubr.bf16.gmra.mxu0 %v380
        %v500 = vpop.f32.mrf.mxu0
        %v501 = vadd.f32 %v355, %v500
        %v502 = vpop.f32.mrf.mxu0
        %v503 = vpop.f32.mrf.mxu0
        %v504 = vadd.f32 %v355, %v503
        %v505 = vpop.f32.mrf.mxu0
        %506 = vmatprep.mubr.bf16.mxu0 0
        %507 = vmatmul.mubr.bf16.gmra.mxu0 %v383
        %v508 = vpop.f32.mrf.mxu0
        %v509 = vadd.f32 %v355, %v508
        %v510 = vpop.f32.mrf.mxu0
        %v511 = vpop.f32.mrf.mxu0
        %v512 = vadd.f32 %v355, %v511
        %v513 = vpop.f32.mrf.mxu0
        %514 = vmatprep.mubr.bf16.mxu0 0
        %515 = vmatmul.mubr.bf16.gmra.mxu0 %v386
        %v516 = vpop.f32.mrf.mxu0
        %v517 = vadd.f32 %v355, %v516
        %v518 = vpop.f32.mrf.mxu0
        %v519 = vpop.f32.mrf.mxu0
        %v520 = vadd.f32 %v355, %v519
        %v521 = vpop.f32.mrf.mxu0
        %522 = vmatprep.mubr.bf16.mxu0 0
        %523 = vmatmul.mubr.bf16.gmra.mxu0 %v389
        %v524 = vpop.f32.mrf.mxu0
        %v525 = vadd.f32 %v355, %v524
        %v526 = vpop.f32.mrf.mxu0
        %v527 = vpop.f32.mrf.mxu0
        %v528 = vadd.f32 %v355, %v527
        %v529 = vpop.f32.mrf.mxu0
        %530 = vmatprep.mubr.bf16.mxu0 0
        %531 = vmatmul.mubr.bf16.gmra.mxu0 %v392
        %v532 = vpop.f32.mrf.mxu0
        %v533 = vadd.f32 %v355, %v532
        %v534 = vpop.f32.mrf.mxu0
        %v535 = vpop.f32.mrf.mxu0
        %v536 = vadd.f32 %v355, %v535
        %v537 = vpop.f32.mrf.mxu0
        %538 = vmatprep.mubr.bf16.mxu0 0
        %539 = vmatmul.mubr.bf16.gmra.mxu0 %v395
        %v540 = vpop.f32.mrf.mxu0
        %v541 = vadd.f32 %v355, %v540
        %v542 = vpop.f32.mrf.mxu0
        %v543 = vpop.f32.mrf.mxu0
        %v544 = vadd.f32 %v355, %v543
        %v545 = vpop.f32.mrf.mxu0
        %546 = vmatprep.mubr.bf16.mxu0 0
        %547 = vmatmul.mubr.bf16.gmra.mxu0 %v398
        %v548 = vpop.f32.mrf.mxu0
        %v549 = vadd.f32 %v355, %v548
        %v550 = vpop.f32.mrf.mxu0
        %v551 = vpop.f32.mrf.mxu0
        %v552 = vadd.f32 %v355, %v551
        %v553 = vpop.f32.mrf.mxu0
        %554 = vmatprep.mubr.bf16.mxu0 0
        %555 = vmatmul.mubr.bf16.gmra.mxu0 %v401
        %v556 = vpop.f32.mrf.mxu0
        %v557 = vadd.f32 %v355, %v556
        %v558 = vpop.f32.mrf.mxu0
        %v559 = vpop.f32.mrf.mxu0
        %v560 = vadd.f32 %v355, %v559
        %v561 = vpop.f32.mrf.mxu0
        %562 = vmatprep.mubr.bf16.mxu0 0
        %563 = vmatmul.mubr.bf16.gmra.mxu0 %v404
        %v564 = vpop.f32.mrf.mxu0
        %v565 = vadd.f32 %v355, %v564
        %v566 = vpop.f32.mrf.mxu0
        %v567 = vpop.f32.mrf.mxu0
        %v568 = vadd.f32 %v355, %v567
        %v569 = vpop.f32.mrf.mxu0
        %570 = vdwg.mxu0
        %v571 = vmax.f32 %v445, 0.0
        %v572 = vmax.f32 %v448, 0.0
        %v573 = vmax.f32 %v453, 0.0
        %v574 = vmax.f32 %v456, 0.0
        %v575 = vmax.f32 %v461, 0.0
        %v576 = vmax.f32 %v464, 0.0
        %v577 = vmax.f32 %v469, 0.0
        %v578 = vmax.f32 %v472, 0.0
        %v579 = vmax.f32 %v477, 0.0
        %v580 = vmax.f32 %v480, 0.0
        %v581 = vmax.f32 %v485, 0.0
        %v582 = vmax.f32 %v488, 0.0
        %v583 = vmax.f32 %v493, 0.0
        %v584 = vmax.f32 %v496, 0.0
        %v585 = vmax.f32 %v501, 0.0
        %v586 = vmax.f32 %v504, 0.0
        %v587 = vmax.f32 %v509, 0.0
        %v588 = vmax.f32 %v512, 0.0
        %v589 = vmax.f32 %v517, 0.0
        %v590 = vmax.f32 %v520, 0.0
        %v591 = vmax.f32 %v525, 0.0
        %v592 = vmax.f32 %v528, 0.0
        %v593 = vmax.f32 %v533, 0.0
        %v594 = vmax.f32 %v536, 0.0
        %v595 = vmax.f32 %v541, 0.0
        %v596 = vmax.f32 %v544, 0.0
        %v597 = vmax.f32 %v549, 0.0
        %v598 = vmax.f32 %v552, 0.0
        %v599 = vmax.f32 %v557, 0.0
        %v600 = vmax.f32 %v560, 0.0
        %v601 = vmax.f32 %v565, 0.0
        %v602 = vmax.f32 %v568, 0.0
        %v603 = vmin.f32 %v571, 6.0
        %v604 = vmin.f32 %v572, 6.0
        %v605 = vmin.f32 %v573, 6.0
        %v606 = vmin.f32 %v574, 6.0
        %v607 = vmin.f32 %v575, 6.0
        %v608 = vmin.f32 %v576, 6.0
        %v609 = vmin.f32 %v577, 6.0
        %v610 = vmin.f32 %v578, 6.0
        %v611 = vmin.f32 %v579, 6.0
        %v612 = vmin.f32 %v580, 6.0
        %v613 = vmin.f32 %v581, 6.0
        %v614 = vmin.f32 %v582, 6.0
        %v615 = vmin.f32 %v583, 6.0
        %v616 = vmin.f32 %v584, 6.0
        %v617 = vmin.f32 %v585, 6.0
        %v618 = vmin.f32 %v586, 6.0
        %v619 = vmin.f32 %v587, 6.0
        %v620 = vmin.f32 %v588, 6.0
        %v621 = vmin.f32 %v589, 6.0
        %v622 = vmin.f32 %v590, 6.0
        %v623 = vmin.f32 %v591, 6.0
        %v624 = vmin.f32 %v592, 6.0
        %v625 = vmin.f32 %v593, 6.0
        %v626 = vmin.f32 %v594, 6.0
        %v627 = vmin.f32 %v595, 6.0
        %v628 = vmin.f32 %v596, 6.0
        %v629 = vmin.f32 %v597, 6.0
        %v630 = vmin.f32 %v598, 6.0
        %v631 = vmin.f32 %v599, 6.0
        %v632 = vmin.f32 %v600, 6.0
        %v633 = vmin.f32 %v601, 6.0
        %v634 = vmin.f32 %v602, 6.0
        %vm635 = vcmask 195584
        %636 = vst.msk [vmem:[#allocation2] sm:$0xff] %vm635, 0.0
        %637 = vst.msk [vmem:[#allocation2 + $0x8] sm:$0xff] %vm635, 0.0
        %vm638 = vcmask 189440
        %639 = vst.msk [vmem:[#allocation2 + $0x10] sm:$0x3] %vm638, 0.0
        %640 = vst.msk [vmem:[#allocation2 + $0x18] sm:$0xff] %vm635, 0.0
        %641 = vst.msk [vmem:[#allocation2 + $0x20] sm:$0xff] %vm635, 0.0
        %642 = vst.msk [vmem:[#allocation2 + $0x28] sm:$0x3] %vm638, 0.0
        %643 = vst.msk [vmem:[#allocation2 + $0x30] sm:$0xff] %vm635, 0.0
        %644 = vst.msk [vmem:[#allocation2 + $0x38] sm:$0xff] %vm635, 0.0
        %645 = vst.msk [vmem:[#allocation2 + $0x40] sm:$0x3] %vm638, 0.0
        %646 = vst.msk [vmem:[#allocation2 + $0x48] sm:$0xff] %vm635, 0.0
        %647 = vst.msk [vmem:[#allocation2 + $0x50] sm:$0xff] %vm635, 0.0
        %648 = vst.msk [vmem:[#allocation2 + $0x58] sm:$0x3] %vm638, 0.0
        %649 = vst.msk [vmem:[#allocation2 + $0x60] sm:$0xff] %vm635, 0.0
        %650 = vst.msk [vmem:[#allocation2 + $0x68] sm:$0xff] %vm635, 0.0
        %651 = vst.msk [vmem:[#allocation2 + $0x70] sm:$0x3] %vm638, 0.0
        %652 = vst.msk [vmem:[#allocation2 + $0x78] sm:$0xff] %vm635, 0.0
        %653 = vst.msk [vmem:[#allocation2 + $0x80] sm:$0xff] %vm635, 0.0
        %654 = vst.msk [vmem:[#allocation2 + $0x88] sm:$0x3] %vm638, 0.0
        %655 = vst.msk [vmem:[#allocation2 + $0x90] sm:$0xff] %vm635, 0.0
        %656 = vst.msk [vmem:[#allocation2 + $0x98] sm:$0xff] %vm635, 0.0
        %657 = vst.msk [vmem:[#allocation2 + $0xa0] sm:$0x3] %vm638, 0.0
        %658 = vst.msk [vmem:[#allocation2 + $0xa8] sm:$0xff] %vm635, 0.0
        %659 = vst.msk [vmem:[#allocation2 + $0xb0] sm:$0xff] %vm635, 0.0
        %660 = vst.msk [vmem:[#allocation2 + $0xb8] sm:$0x3] %vm638, 0.0
        %661 = vst.msk [vmem:[#allocation2 + $0xc0] sm:$0xff] %vm635, 0.0
        %662 = vst.msk [vmem:[#allocation2 + $0xc8] sm:$0xff] %vm635, 0.0
        %663 = vst.msk [vmem:[#allocation2 + $0xd0] sm:$0x3] %vm638, 0.0
        %664 = vst.msk [vmem:[#allocation2 + $0xd8] sm:$0xff] %vm635, 0.0
        %665 = vst.msk [vmem:[#allocation2 + $0xe0] sm:$0xff] %vm635, 0.0
        %666 = vst.msk [vmem:[#allocation2 + $0xe8] sm:$0x3] %vm638, 0.0
        %667 = vst.msk [vmem:[#allocation2 + $0xf0] sm:$0xff] %vm635, 0.0
        %668 = vst.msk [vmem:[#allocation2 + $0xf8] sm:$0xff] %vm635, 0.0
        %669 = vst.msk [vmem:[#allocation2 + $0x100] sm:$0x3] %vm638, 0.0
        %670 = vst.msk [vmem:[#allocation2 + $0x108] sm:$0xff] %vm635, 0.0
        %671 = vst.msk [vmem:[#allocation2 + $0x110] sm:$0xff] %vm635, 0.0
        %672 = vst.msk [vmem:[#allocation2 + $0x118] sm:$0x3] %vm638, 0.0
        %673 = vst.msk [vmem:[#allocation2 + $0x120] sm:$0xff] %vm635, 0.0
        %674 = vst.msk [vmem:[#allocation2 + $0x128] sm:$0xff] %vm635, 0.0
        %675 = vst.msk [vmem:[#allocation2 + $0x130] sm:$0x3] %vm638, 0.0
        %676 = vst.msk [vmem:[#allocation2 + $0x138] sm:$0xff] %vm635, 0.0
        %677 = vst.msk [vmem:[#allocation2 + $0x140] sm:$0xff] %vm635, 0.0
        %678 = vst.msk [vmem:[#allocation2 + $0x148] sm:$0x3] %vm638, 0.0
        %679 = vst.msk [vmem:[#allocation2 + $0x150] sm:$0xff] %vm635, 0.0
        %680 = vst.msk [vmem:[#allocation2 + $0x158] sm:$0xff] %vm635, 0.0
        %681 = vst.msk [vmem:[#allocation2 + $0x160] sm:$0x3] %vm638, 0.0
        %682 = vst.msk [vmem:[#allocation2 + $0x168] sm:$0xff] %vm635, 0.0
        %683 = vst.msk [vmem:[#allocation2 + $0x170] sm:$0xff] %vm635, 0.0
        %684 = vst.msk [vmem:[#allocation2 + $0x178] sm:$0x3] %vm638, 0.0
        %685 = vst.msk [vmem:[#allocation2 + $0x180] sm:$0xff] %vm635, 0.0
        %686 = vst.msk [vmem:[#allocation2 + $0x188] sm:$0xff] %vm635, 0.0
        %687 = vst.msk [vmem:[#allocation2 + $0x190] sm:$0x3] %vm638, 0.0
        %688 = vst.msk [vmem:[#allocation2 + $0x198] sm:$0xff] %vm635, 0.0
        %689 = vst.msk [vmem:[#allocation2 + $0x1a0] sm:$0xff] %vm635, 0.0
        %690 = vst.msk [vmem:[#allocation2 + $0x1a8] sm:$0x3] %vm638, 0.0
        %s691 = scalar_lea.vmem [#allocation2], 24
        %692 = vst.msk [vmem:[%s691 + $0x1] sm:$0xff] %vm635, %v603
        %693 = vst.msk [vmem:[%s691 + $0x9] sm:$0xff] %vm635, %v604
        %694 = vst.msk [vmem:[%s691 + $0x19] sm:$0xff] %vm635, %v605
        %695 = vst.msk [vmem:[%s691 + $0x21] sm:$0xff] %vm635, %v606
        %696 = vst.msk [vmem:[%s691 + $0x31] sm:$0xff] %vm635, %v607
        %697 = vst.msk [vmem:[%s691 + $0x39] sm:$0xff] %vm635, %v608
        %698 = vst.msk [vmem:[%s691 + $0x49] sm:$0xff] %vm635, %v609
        %699 = vst.msk [vmem:[%s691 + $0x51] sm:$0xff] %vm635, %v610
        %700 = vst.msk [vmem:[%s691 + $0x61] sm:$0xff] %vm635, %v611
        %701 = vst.msk [vmem:[%s691 + $0x69] sm:$0xff] %vm635, %v612
        %702 = vst.msk [vmem:[%s691 + $0x79] sm:$0xff] %vm635, %v613
        %703 = vst.msk [vmem:[%s691 + $0x81] sm:$0xff] %vm635, %v614
        %704 = vst.msk [vmem:[%s691 + $0x91] sm:$0xff] %vm635, %v615
        %705 = vst.msk [vmem:[%s691 + $0x99] sm:$0xff] %vm635, %v616
        %706 = vst.msk [vmem:[%s691 + $0xa9] sm:$0xff] %vm635, %v617
        %707 = vst.msk [vmem:[%s691 + $0xb1] sm:$0xff] %vm635, %v618
        %708 = vst.msk [vmem:[%s691 + $0xc1] sm:$0xff] %vm635, %v619
        %709 = vst.msk [vmem:[%s691 + $0xc9] sm:$0xff] %vm635, %v620
        %710 = vst.msk [vmem:[%s691 + $0xd9] sm:$0xff] %vm635, %v621
        %711 = vst.msk [vmem:[%s691 + $0xe1] sm:$0xff] %vm635, %v622
        %712 = vst.msk [vmem:[%s691 + $0xf1] sm:$0xff] %vm635, %v623
        %713 = vst.msk [vmem:[%s691 + $0xf9] sm:$0xff] %vm635, %v624
        %714 = vst.msk [vmem:[%s691 + $0x109] sm:$0xff] %vm635, %v625
        %715 = vst.msk [vmem:[%s691 + $0x111] sm:$0xff] %vm635, %v626
        %716 = vst.msk [vmem:[%s691 + $0x121] sm:$0xff] %vm635, %v627
        %717 = vst.msk [vmem:[%s691 + $0x129] sm:$0xff] %vm635, %v628
        %718 = vst.msk [vmem:[%s691 + $0x139] sm:$0xff] %vm635, %v629
        %719 = vst.msk [vmem:[%s691 + $0x141] sm:$0xff] %vm635, %v630
        %720 = vst.msk [vmem:[%s691 + $0x151] sm:$0xff] %vm635, %v631
        %721 = vst.msk [vmem:[%s691 + $0x159] sm:$0xff] %vm635, %v632
        %722 = vst.msk [vmem:[%s691 + $0x169] sm:$0xff] %vm635, %v633
        %723 = vst.msk [vmem:[%s691 + $0x171] sm:$0xff] %vm635, %v634
        %v724 = vld [vmem:[#allocation2] sm:$0xff]
        %v725 = vld [vmem:[#allocation2 + $0x8] sm:$0xff]
        %v726 = vld [vmem:[#allocation2 + $0x10] sm:$0x3]
        %v727 = vld [vmem:[#allocation2 + $0x18] sm:$0xff]
        %v728 = vld [vmem:[#allocation2 + $0x20] sm:$0xff]
        %v729 = vld [vmem:[#allocation2 + $0x28] sm:$0x3]
        %v730 = vld [vmem:[#allocation2 + $0x30] sm:$0xff]
        %v731 = vld [vmem:[#allocation2 + $0x38] sm:$0xff]
        %v732 = vld [vmem:[#allocation2 + $0x40] sm:$0x3]
        %v733 = vld [vmem:[#allocation2 + $0x48] sm:$0xff]
        %v734 = vld [vmem:[#allocation2 + $0x50] sm:$0xff]
        %v735 = vld [vmem:[#allocation2 + $0x58] sm:$0x3]
        %v736 = vld [vmem:[#allocation2 + $0x60] sm:$0xff]
        %v737 = vld [vmem:[#allocation2 + $0x68] sm:$0xff]
        %v738 = vld [vmem:[#allocation2 + $0x70] sm:$0x3]
        %v739 = vld [vmem:[#allocation2 + $0x78] sm:$0xff]
        %v740 = vld [vmem:[#allocation2 + $0x80] sm:$0xff]
        %v741 = vld [vmem:[#allocation2 + $0x88] sm:$0x3]
        %v742 = vld [vmem:[#allocation2 + $0x90] sm:$0xff]
        %v743 = vld [vmem:[#allocation2 + $0x98] sm:$0xff]
        %v744 = vld [vmem:[#allocation2 + $0xa0] sm:$0x3]
        %v745 = vld [vmem:[#allocation2 + $0xa8] sm:$0xff]
        %v746 = vld [vmem:[#allocation2 + $0xb0] sm:$0xff]
        %v747 = vld [vmem:[#allocation2 + $0xb8] sm:$0x3]
        %v748 = vld [vmem:[#allocation2 + $0xc0] sm:$0xff]
        %v749 = vld [vmem:[#allocation2 + $0xc8] sm:$0xff]
        %v750 = vld [vmem:[#allocation2 + $0xd0] sm:$0x3]
        %v751 = vld [vmem:[#allocation2 + $0xd8] sm:$0xff]
        %v752 = vld [vmem:[#allocation2 + $0xe0] sm:$0xff]
        %v753 = vld [vmem:[#allocation2 + $0xe8] sm:$0x3]
        %v754 = vld [vmem:[#allocation2 + $0xf0] sm:$0xff]
        %v755 = vld [vmem:[#allocation2 + $0xf8] sm:$0xff]
        %v756 = vld [vmem:[#allocation2 + $0x100] sm:$0x3]
        %v757 = vld [vmem:[#allocation2 + $0x108] sm:$0xff]
        %v758 = vld [vmem:[#allocation2 + $0x110] sm:$0xff]
        %v759 = vld [vmem:[#allocation2 + $0x118] sm:$0x3]
        %v760 = vld [vmem:[#allocation2 + $0x120] sm:$0xff]
        %v761 = vld [vmem:[#allocation2 + $0x128] sm:$0xff]
        %v762 = vld [vmem:[#allocation2 + $0x130] sm:$0x3]
        %v763 = vld [vmem:[#allocation2 + $0x138] sm:$0xff]
        %v764 = vld [vmem:[#allocation2 + $0x140] sm:$0xff]
        %v765 = vld [vmem:[#allocation2 + $0x148] sm:$0x3]
        %v766 = vld [vmem:[#allocation2 + $0x150] sm:$0xff]
        %v767 = vld [vmem:[#allocation2 + $0x158] sm:$0xff]
        %v768 = vld [vmem:[#allocation2 + $0x160] sm:$0x3]
        %v769 = vld [vmem:[#allocation2 + $0x168] sm:$0xff]
        %v770 = vld [vmem:[#allocation2 + $0x170] sm:$0xff]
        %v771 = vld [vmem:[#allocation2 + $0x178] sm:$0x3]
        %v772 = vld [vmem:[#allocation2 + $0x180] sm:$0xff]
        %v773 = vld [vmem:[#allocation2 + $0x188] sm:$0xff]
        %v774 = vld [vmem:[#allocation2 + $0x190] sm:$0x3]
        %v775 = vld [vmem:[#allocation2 + $0x198] sm:$0xff]
        %v776 = vld [vmem:[#allocation2 + $0x1a0] sm:$0xff]
        %v777 = vld [vmem:[#allocation2 + $0x1a8] sm:$0x3]
        %v778 = vld [vmem:[#allocation6] sm:$0xff]
        %v779 = vld [vmem:[#allocation6 + $0x8] sm:$0x1]
        %v780 = vlaneseq
        %v781 = vshrl.u32 %v780, 7
        %v782 = vsub.s32 0, %v781
        %v783 = vrot.slane %v778, %v782
        %v784 = vmul.f32 %v724, %v783
        %v785 = vmul.f32 %v725, %v783
        %v786 = vmul.f32 %v727, %v783
        %v787 = vmul.f32 %v728, %v783
        %v788 = vmul.f32 %v730, %v783
        %v789 = vmul.f32 %v731, %v783
        %v790 = vmul.f32 %v733, %v783
        %v791 = vmul.f32 %v734, %v783
        %v792 = vmul.f32 %v736, %v783
        %v793 = vmul.f32 %v737, %v783
        %v794 = vmul.f32 %v739, %v783
        %v795 = vmul.f32 %v740, %v783
        %v796 = vmul.f32 %v742, %v783
        %v797 = vmul.f32 %v743, %v783
        %v798 = vmul.f32 %v745, %v783
        %v799 = vmul.f32 %v746, %v783
        %v800 = vmul.f32 %v748, %v783
        %v801 = vmul.f32 %v749, %v783
        %v802 = vmul.f32 %v751, %v783
        %v803 = vmul.f32 %v752, %v783
        %v804 = vmul.f32 %v754, %v783
        %v805 = vmul.f32 %v755, %v783
        %v806 = vmul.f32 %v757, %v783
        %v807 = vmul.f32 %v758, %v783
        %v808 = vmul.f32 %v760, %v783
        %v809 = vmul.f32 %v761, %v783
        %v810 = vmul.f32 %v763, %v783
        %v811 = vmul.f32 %v764, %v783
        %v812 = vmul.f32 %v766, %v783
        %v813 = vmul.f32 %v767, %v783
        %v814 = vmul.f32 %v769, %v783
        %v815 = vmul.f32 %v770, %v783
        %v816 = vlaneseq
        %v817 = vshrl.u32 %v816, 7
        %v818 = vsub.s32 1, %v817
        %v819 = vrot.slane %v778, %v818
        %v820 = vmul.f32 %v724, %v819
        %v821 = vmul.f32 %v725, %v819
        %v822 = vmul.f32 %v726, %v819
        %v823 = vmul.f32 %v727, %v819
        %v824 = vmul.f32 %v728, %v819
        %v825 = vmul.f32 %v729, %v819
        %v826 = vmul.f32 %v730, %v819
        %v827 = vmul.f32 %v731, %v819
        %v828 = vmul.f32 %v732, %v819
        %v829 = vmul.f32 %v733, %v819
        %v830 = vmul.f32 %v734, %v819
        %v831 = vmul.f32 %v735, %v819
        %v832 = vmul.f32 %v736, %v819
        %v833 = vmul.f32 %v737, %v819
        %v834 = vmul.f32 %v738, %v819
        %v835 = vmul.f32 %v739, %v819
        %v836 = vmul.f32 %v740, %v819
        %v837 = vmul.f32 %v741, %v819
        %v838 = vmul.f32 %v742, %v819
        %v839 = vmul.f32 %v743, %v819
        %v840 = vmul.f32 %v744, %v819
        %v841 = vmul.f32 %v745, %v819
        %v842 = vmul.f32 %v746, %v819
        %v843 = vmul.f32 %v747, %v819
        %v844 = vmul.f32 %v748, %v819
        %v845 = vmul.f32 %v749, %v819
        %v846 = vmul.f32 %v750, %v819
        %v847 = vmul.f32 %v751, %v819
        %v848 = vmul.f32 %v752, %v819
        %v849 = vmul.f32 %v753, %v819
        %v850 = vmul.f32 %v754, %v819
        %v851 = vmul.f32 %v755, %v819
        %v852 = vmul.f32 %v756, %v819
        %v853 = vmul.f32 %v757, %v819
        %v854 = vmul.f32 %v758, %v819
        %v855 = vmul.f32 %v759, %v819
        %v856 = vmul.f32 %v760, %v819
        %v857 = vmul.f32 %v761, %v819
        %v858 = vmul.f32 %v762, %v819
        %v859 = vmul.f32 %v763, %v819
        %v860 = vmul.f32 %v764, %v819
        %v861 = vmul.f32 %v765, %v819
        %v862 = vmul.f32 %v766, %v819
        %v863 = vmul.f32 %v767, %v819
        %v864 = vmul.f32 %v768, %v819
        %v865 = vmul.f32 %v769, %v819
        %v866 = vmul.f32 %v770, %v819
        %v867 = vmul.f32 %v771, %v819
        %vm916 = vcmask 1046528
        %v917 = vrot.slane %v820, 1
        %v918 = vrot.slane %v821, 1
        %v919 = vsel %vm916, %v917, %v918
        %v920 = vrot.slane %v822, 1
        %v921 = vsel %vm916, %v918, %v920
        %v922 = vrot.slane %v823, 1
        %v923 = vrot.slane %v824, 1
        %v924 = vsel %vm916, %v922, %v923
        %v925 = vrot.slane %v825, 1
        %v926 = vsel %vm916, %v923, %v925
        %v927 = vrot.slane %v826, 1
        %v928 = vrot.slane %v827, 1
        %v929 = vsel %vm916, %v927, %v928
        %v930 = vrot.slane %v828, 1
        %v931 = vsel %vm916, %v928, %v930
        %v932 = vrot.slane %v829, 1
        %v933 = vrot.slane %v830, 1
        %v934 = vsel %vm916, %v932, %v933
        %v935 = vrot.slane %v831, 1
        %v936 = vsel %vm916, %v933, %v935
        %v937 = vrot.slane %v832, 1
        %v938 = vrot.slane %v833, 1
        %v939 = vsel %vm916, %v937, %v938
        %v940 = vrot.slane %v834, 1
        %v941 = vsel %vm916, %v938, %v940
        %v942 = vrot.slane %v835, 1
        %v943 = vrot.slane %v836, 1
        %v944 = vsel %vm916, %v942, %v943
        %v945 = vrot.slane %v837, 1
        %v946 = vsel %vm916, %v943, %v945
        %v947 = vrot.slane %v838, 1
        %v948 = vrot.slane %v839, 1
        %v949 = vsel %vm916, %v947, %v948
        %v950 = vrot.slane %v840, 1
        %v951 = vsel %vm916, %v948, %v950
        %v952 = vrot.slane %v841, 1
        %v953 = vrot.slane %v842, 1
        %v954 = vsel %vm916, %v952, %v953
        %v955 = vrot.slane %v843, 1
        %v956 = vsel %vm916, %v953, %v955
        %v957 = vrot.slane %v844, 1
        %v958 = vrot.slane %v845, 1
        %v959 = vsel %vm916, %v957, %v958
        %v960 = vrot.slane %v846, 1
        %v961 = vsel %vm916, %v958, %v960
        %v962 = vrot.slane %v847, 1
        %v963 = vrot.slane %v848, 1
        %v964 = vsel %vm916, %v962, %v963
        %v965 = vrot.slane %v849, 1
        %v966 = vsel %vm916, %v963, %v965
        %v967 = vrot.slane %v850, 1
        %v968 = vrot.slane %v851, 1
        %v969 = vsel %vm916, %v967, %v968
        %v970 = vrot.slane %v852, 1
        %v971 = vsel %vm916, %v968, %v970
        %v972 = vrot.slane %v853, 1
        %v973 = vrot.slane %v854, 1
        %v974 = vsel %vm916, %v972, %v973
        %v975 = vrot.slane %v855, 1
        %v976 = vsel %vm916, %v973, %v975
        %v977 = vrot.slane %v856, 1
        %v978 = vrot.slane %v857, 1
        %v979 = vsel %vm916, %v977, %v978
        %v980 = vrot.slane %v858, 1
        %v981 = vsel %vm916, %v978, %v980
        %v982 = vrot.slane %v859, 1
        %v983 = vrot.slane %v860, 1
        %v984 = vsel %vm916, %v982, %v983
        %v985 = vrot.slane %v861, 1
        %v986 = vsel %vm916, %v983, %v985
        %v987 = vrot.slane %v862, 1
        %v988 = vrot.slane %v863, 1
        %v989 = vsel %vm916, %v987, %v988
        %v990 = vrot.slane %v864, 1
        %v991 = vsel %vm916, %v988, %v990
        %v992 = vrot.slane %v865, 1
        %v993 = vrot.slane %v866, 1
        %v994 = vsel %vm916, %v992, %v993
        %v995 = vrot.slane %v867, 1
        %v996 = vsel %vm916, %v993, %v995
        %v1029 = vadd.f32 %v784, %v919
        %v1030 = vadd.f32 %v785, %v921
        %v1031 = vadd.f32 %v786, %v924
        %v1032 = vadd.f32 %v787, %v926
        %v1033 = vadd.f32 %v788, %v929
        %v1034 = vadd.f32 %v789, %v931
        %v1035 = vadd.f32 %v790, %v934
        %v1036 = vadd.f32 %v791, %v936
        %v1037 = vadd.f32 %v792, %v939
        %v1038 = vadd.f32 %v793, %v941
        %v1039 = vadd.f32 %v794, %v944
        %v1040 = vadd.f32 %v795, %v946
        %v1041 = vadd.f32 %v796, %v949
        %v1042 = vadd.f32 %v797, %v951
        %v1043 = vadd.f32 %v798, %v954
        %v1044 = vadd.f32 %v799, %v956
        %v1045 = vadd.f32 %v800, %v959
        %v1046 = vadd.f32 %v801, %v961
        %v1047 = vadd.f32 %v802, %v964
        %v1048 = vadd.f32 %v803, %v966
        %v1049 = vadd.f32 %v804, %v969
        %v1050 = vadd.f32 %v805, %v971
        %v1051 = vadd.f32 %v806, %v974
        %v1052 = vadd.f32 %v807, %v976
        %v1053 = vadd.f32 %v808, %v979
        %v1054 = vadd.f32 %v809, %v981
        %v1055 = vadd.f32 %v810, %v984
        %v1056 = vadd.f32 %v811, %v986
        %v1057 = vadd.f32 %v812, %v989
        %v1058 = vadd.f32 %v813, %v991
        %v1059 = vadd.f32 %v814, %v994
        %v1060 = vadd.f32 %v815, %v996
        %v1061 = vlaneseq
        %v1062 = vshrl.u32 %v1061, 7
        %v1063 = vsub.s32 2, %v1062
        %v1064 = vrot.slane %v778, %v1063
        %v1065 = vmul.f32 %v724, %v1064
        %v1066 = vmul.f32 %v725, %v1064
        %v1067 = vmul.f32 %v726, %v1064
        %v1068 = vmul.f32 %v727, %v1064
        %v1069 = vmul.f32 %v728, %v1064
        %v1070 = vmul.f32 %v729, %v1064
        %v1071 = vmul.f32 %v730, %v1064
        %v1072 = vmul.f32 %v731, %v1064
        %v1073 = vmul.f32 %v732, %v1064
        %v1074 = vmul.f32 %v733, %v1064
        %v1075 = vmul.f32 %v734, %v1064
        %v1076 = vmul.f32 %v735, %v1064
        %v1077 = vmul.f32 %v736, %v1064
        %v1078 = vmul.f32 %v737, %v1064
        %v1079 = vmul.f32 %v738, %v1064
        %v1080 = vmul.f32 %v739, %v1064
        %v1081 = vmul.f32 %v740, %v1064
        %v1082 = vmul.f32 %v741, %v1064
        %v1083 = vmul.f32 %v742, %v1064
        %v1084 = vmul.f32 %v743, %v1064
        %v1085 = vmul.f32 %v744, %v1064
        %v1086 = vmul.f32 %v745, %v1064
        %v1087 = vmul.f32 %v746, %v1064
        %v1088 = vmul.f32 %v747, %v1064
        %v1089 = vmul.f32 %v748, %v1064
        %v1090 = vmul.f32 %v749, %v1064
        %v1091 = vmul.f32 %v750, %v1064
        %v1092 = vmul.f32 %v751, %v1064
        %v1093 = vmul.f32 %v752, %v1064
        %v1094 = vmul.f32 %v753, %v1064
        %v1095 = vmul.f32 %v754, %v1064
        %v1096 = vmul.f32 %v755, %v1064
        %v1097 = vmul.f32 %v756, %v1064
        %v1098 = vmul.f32 %v757, %v1064
        %v1099 = vmul.f32 %v758, %v1064
        %v1100 = vmul.f32 %v759, %v1064
        %v1101 = vmul.f32 %v760, %v1064
        %v1102 = vmul.f32 %v761, %v1064
        %v1103 = vmul.f32 %v762, %v1064
        %v1104 = vmul.f32 %v763, %v1064
        %v1105 = vmul.f32 %v764, %v1064
        %v1106 = vmul.f32 %v765, %v1064
        %v1107 = vmul.f32 %v766, %v1064
        %v1108 = vmul.f32 %v767, %v1064
        %v1109 = vmul.f32 %v768, %v1064
        %v1110 = vmul.f32 %v769, %v1064
        %v1111 = vmul.f32 %v770, %v1064
        %v1112 = vmul.f32 %v771, %v1064
        %vm1161 = vcmask 1045504
        %v1162 = vrot.slane %v1065, 2
        %v1163 = vrot.slane %v1066, 2
        %v1164 = vsel %vm1161, %v1162, %v1163
        %v1165 = vrot.slane %v1067, 2
        %v1166 = vsel %vm1161, %v1163, %v1165
        %v1167 = vrot.slane %v1068, 2
        %v1168 = vrot.slane %v1069, 2
        %v1169 = vsel %vm1161, %v1167, %v1168
        %v1170 = vrot.slane %v1070, 2
        %v1171 = vsel %vm1161, %v1168, %v1170
        %v1172 = vrot.slane %v1071, 2
        %v1173 = vrot.slane %v1072, 2
        %v1174 = vsel %vm1161, %v1172, %v1173
        %v1175 = vrot.slane %v1073, 2
        %v1176 = vsel %vm1161, %v1173, %v1175
        %v1177 = vrot.slane %v1074, 2
        %v1178 = vrot.slane %v1075, 2
        %v1179 = vsel %vm1161, %v1177, %v1178
        %v1180 = vrot.slane %v1076, 2
        %v1181 = vsel %vm1161, %v1178, %v1180
        %v1182 = vrot.slane %v1077, 2
        %v1183 = vrot.slane %v1078, 2
        %v1184 = vsel %vm1161, %v1182, %v1183
        %v1185 = vrot.slane %v1079, 2
        %v1186 = vsel %vm1161, %v1183, %v1185
        %v1187 = vrot.slane %v1080, 2
        %v1188 = vrot.slane %v1081, 2
        %v1189 = vsel %vm1161, %v1187, %v1188
        %v1190 = vrot.slane %v1082, 2
        %v1191 = vsel %vm1161, %v1188, %v1190
        %v1192 = vrot.slane %v1083, 2
        %v1193 = vrot.slane %v1084, 2
        %v1194 = vsel %vm1161, %v1192, %v1193
        %v1195 = vrot.slane %v1085, 2
        %v1196 = vsel %vm1161, %v1193, %v1195
        %v1197 = vrot.slane %v1086, 2
        %v1198 = vrot.slane %v1087, 2
        %v1199 = vsel %vm1161, %v1197, %v1198
        %v1200 = vrot.slane %v1088, 2
        %v1201 = vsel %vm1161, %v1198, %v1200
        %v1202 = vrot.slane %v1089, 2
        %v1203 = vrot.slane %v1090, 2
        %v1204 = vsel %vm1161, %v1202, %v1203
        %v1205 = vrot.slane %v1091, 2
        %v1206 = vsel %vm1161, %v1203, %v1205
        %v1207 = vrot.slane %v1092, 2
        %v1208 = vrot.slane %v1093, 2
        %v1209 = vsel %vm1161, %v1207, %v1208
        %v1210 = vrot.slane %v1094, 2
        %v1211 = vsel %vm1161, %v1208, %v1210
        %v1212 = vrot.slane %v1095, 2
        %v1213 = vrot.slane %v1096, 2
        %v1214 = vsel %vm1161, %v1212, %v1213
        %v1215 = vrot.slane %v1097, 2
        %v1216 = vsel %vm1161, %v1213, %v1215
        %v1217 = vrot.slane %v1098, 2
        %v1218 = vrot.slane %v1099, 2
        %v1219 = vsel %vm1161, %v1217, %v1218
        %v1220 = vrot.slane %v1100, 2
        %v1221 = vsel %vm1161, %v1218, %v1220
        %v1222 = vrot.slane %v1101, 2
        %v1223 = vrot.slane %v1102, 2
        %v1224 = vsel %vm1161, %v1222, %v1223
        %v1225 = vrot.slane %v1103, 2
        %v1226 = vsel %vm1161, %v1223, %v1225
        %v1227 = vrot.slane %v1104, 2
        %v1228 = vrot.slane %v1105, 2
        %v1229 = vsel %vm1161, %v1227, %v1228
        %v1230 = vrot.slane %v1106, 2
        %v1231 = vsel %vm1161, %v1228, %v1230
        %v1232 = vrot.slane %v1107, 2
        %v1233 = vrot.slane %v1108, 2
        %v1234 = vsel %vm1161, %v1232, %v1233
        %v1235 = vrot.slane %v1109, 2
        %v1236 = vsel %vm1161, %v1233, %v1235
        %v1237 = vrot.slane %v1110, 2
        %v1238 = vrot.slane %v1111, 2
        %v1239 = vsel %vm1161, %v1237, %v1238
        %v1240 = vrot.slane %v1112, 2
        %v1241 = vsel %vm1161, %v1238, %v1240
        %v1274 = vadd.f32 %v1029, %v1164
        %v1275 = vadd.f32 %v1030, %v1166
        %v1276 = vadd.f32 %v1031, %v1169
        %v1277 = vadd.f32 %v1032, %v1171
        %v1278 = vadd.f32 %v1033, %v1174
        %v1279 = vadd.f32 %v1034, %v1176
        %v1280 = vadd.f32 %v1035, %v1179
        %v1281 = vadd.f32 %v1036, %v1181
        %v1282 = vadd.f32 %v1037, %v1184
        %v1283 = vadd.f32 %v1038, %v1186
        %v1284 = vadd.f32 %v1039, %v1189
        %v1285 = vadd.f32 %v1040, %v1191
        %v1286 = vadd.f32 %v1041, %v1194
        %v1287 = vadd.f32 %v1042, %v1196
        %v1288 = vadd.f32 %v1043, %v1199
        %v1289 = vadd.f32 %v1044, %v1201
        %v1290 = vadd.f32 %v1045, %v1204
        %v1291 = vadd.f32 %v1046, %v1206
        %v1292 = vadd.f32 %v1047, %v1209
        %v1293 = vadd.f32 %v1048, %v1211
        %v1294 = vadd.f32 %v1049, %v1214
        %v1295 = vadd.f32 %v1050, %v1216
        %v1296 = vadd.f32 %v1051, %v1219
        %v1297 = vadd.f32 %v1052, %v1221
        %v1298 = vadd.f32 %v1053, %v1224
        %v1299 = vadd.f32 %v1054, %v1226
        %v1300 = vadd.f32 %v1055, %v1229
        %v1301 = vadd.f32 %v1056, %v1231
        %v1302 = vadd.f32 %v1057, %v1234
        %v1303 = vadd.f32 %v1058, %v1236
        %v1304 = vadd.f32 %v1059, %v1239
        %v1305 = vadd.f32 %v1060, %v1241
        %v1306 = vlaneseq
        %v1307 = vshrl.u32 %v1306, 7
        %v1308 = vsub.s32 3, %v1307
        %v1309 = vrot.slane %v778, %v1308
        %v1310 = vmul.f32 %v727, %v1309
        %v1311 = vmul.f32 %v728, %v1309
        %v1312 = vmul.f32 %v730, %v1309
        %v1313 = vmul.f32 %v731, %v1309
        %v1314 = vmul.f32 %v733, %v1309
        %v1315 = vmul.f32 %v734, %v1309
        %v1316 = vmul.f32 %v736, %v1309
        %v1317 = vmul.f32 %v737, %v1309
        %v1318 = vmul.f32 %v739, %v1309
        %v1319 = vmul.f32 %v740, %v1309
        %v1320 = vmul.f32 %v742, %v1309
        %v1321 = vmul.f32 %v743, %v1309
        %v1322 = vmul.f32 %v745, %v1309
        %v1323 = vmul.f32 %v746, %v1309
        %v1324 = vmul.f32 %v748, %v1309
        %v1325 = vmul.f32 %v749, %v1309
        %v1326 = vmul.f32 %v751, %v1309
        %v1327 = vmul.f32 %v752, %v1309
        %v1328 = vmul.f32 %v754, %v1309
        %v1329 = vmul.f32 %v755, %v1309
        %v1330 = vmul.f32 %v757, %v1309
        %v1331 = vmul.f32 %v758, %v1309
        %v1332 = vmul.f32 %v760, %v1309
        %v1333 = vmul.f32 %v761, %v1309
        %v1334 = vmul.f32 %v763, %v1309
        %v1335 = vmul.f32 %v764, %v1309
        %v1336 = vmul.f32 %v766, %v1309
        %v1337 = vmul.f32 %v767, %v1309
        %v1338 = vmul.f32 %v769, %v1309
        %v1339 = vmul.f32 %v770, %v1309
        %v1340 = vmul.f32 %v772, %v1309
        %v1341 = vmul.f32 %v773, %v1309
        %v1342 = vadd.f32 %v1274, %v1310
        %v1343 = vadd.f32 %v1275, %v1311
        %v1344 = vadd.f32 %v1276, %v1312
        %v1345 = vadd.f32 %v1277, %v1313
        %v1346 = vadd.f32 %v1278, %v1314
        %v1347 = vadd.f32 %v1279, %v1315
        %v1348 = vadd.f32 %v1280, %v1316
        %v1349 = vadd.f32 %v1281, %v1317
        %v1350 = vadd.f32 %v1282, %v1318
        %v1351 = vadd.f32 %v1283, %v1319
        %v1352 = vadd.f32 %v1284, %v1320
        %v1353 = vadd.f32 %v1285, %v1321
        %v1354 = vadd.f32 %v1286, %v1322
        %v1355 = vadd.f32 %v1287, %v1323
        %v1356 = vadd.f32 %v1288, %v1324
        %v1357 = vadd.f32 %v1289, %v1325
        %v1358 = vadd.f32 %v1290, %v1326
        %v1359 = vadd.f32 %v1291, %v1327
        %v1360 = vadd.f32 %v1292, %v1328
        %v1361 = vadd.f32 %v1293, %v1329
        %v1362 = vadd.f32 %v1294, %v1330
        %v1363 = vadd.f32 %v1295, %v1331
        %v1364 = vadd.f32 %v1296, %v1332
        %v1365 = vadd.f32 %v1297, %v1333
        %v1366 = vadd.f32 %v1298, %v1334
        %v1367 = vadd.f32 %v1299, %v1335
        %v1368 = vadd.f32 %v1300, %v1336
        %v1369 = vadd.f32 %v1301, %v1337
        %v1370 = vadd.f32 %v1302, %v1338
        %v1371 = vadd.f32 %v1303, %v1339
        %v1372 = vadd.f32 %v1304, %v1340
        %v1373 = vadd.f32 %v1305, %v1341
        %v1374 = vlaneseq
        %v1375 = vshrl.u32 %v1374, 7
        %v1376 = vsub.s32 4, %v1375
        %v1377 = vrot.slane %v778, %v1376
        %v1378 = vmul.f32 %v727, %v1377
        %v1379 = vmul.f32 %v728, %v1377
        %v1380 = vmul.f32 %v729, %v1377
        %v1381 = vmul.f32 %v730, %v1377
        %v1382 = vmul.f32 %v731, %v1377
        %v1383 = vmul.f32 %v732, %v1377
        %v1384 = vmul.f32 %v733, %v1377
        %v1385 = vmul.f32 %v734, %v1377
        %v1386 = vmul.f32 %v735, %v1377
        %v1387 = vmul.f32 %v736, %v1377
        %v1388 = vmul.f32 %v737, %v1377
        %v1389 = vmul.f32 %v738, %v1377
        %v1390 = vmul.f32 %v739, %v1377
        %v1391 = vmul.f32 %v740, %v1377
        %v1392 = vmul.f32 %v741, %v1377
        %v1393 = vmul.f32 %v742, %v1377
        %v1394 = vmul.f32 %v743, %v1377
        %v1395 = vmul.f32 %v744, %v1377
        %v1396 = vmul.f32 %v745, %v1377
        %v1397 = vmul.f32 %v746, %v1377
        %v1398 = vmul.f32 %v747, %v1377
        %v1399 = vmul.f32 %v748, %v1377
        %v1400 = vmul.f32 %v749, %v1377
        %v1401 = vmul.f32 %v750, %v1377
        %v1402 = vmul.f32 %v751, %v1377
        %v1403 = vmul.f32 %v752, %v1377
        %v1404 = vmul.f32 %v753, %v1377
        %v1405 = vmul.f32 %v754, %v1377
        %v1406 = vmul.f32 %v755, %v1377
        %v1407 = vmul.f32 %v756, %v1377
        %v1408 = vmul.f32 %v757, %v1377
        %v1409 = vmul.f32 %v758, %v1377
        %v1410 = vmul.f32 %v759, %v1377
        %v1411 = vmul.f32 %v760, %v1377
        %v1412 = vmul.f32 %v761, %v1377
        %v1413 = vmul.f32 %v762, %v1377
        %v1414 = vmul.f32 %v763, %v1377
        %v1415 = vmul.f32 %v764, %v1377
        %v1416 = vmul.f32 %v765, %v1377
        %v1417 = vmul.f32 %v766, %v1377
        %v1418 = vmul.f32 %v767, %v1377
        %v1419 = vmul.f32 %v768, %v1377
        %v1420 = vmul.f32 %v769, %v1377
        %v1421 = vmul.f32 %v770, %v1377
        %v1422 = vmul.f32 %v771, %v1377
        %v1423 = vmul.f32 %v772, %v1377
        %v1424 = vmul.f32 %v773, %v1377
        %v1425 = vmul.f32 %v774, %v1377
        %v1474 = vrot.slane %v1378, 1
        %v1475 = vrot.slane %v1379, 1
        %v1476 = vsel %vm916, %v1474, %v1475
        %v1477 = vrot.slane %v1380, 1
        %v1478 = vsel %vm916, %v1475, %v1477
        %v1479 = vrot.slane %v1381, 1
        %v1480 = vrot.slane %v1382, 1
        %v1481 = vsel %vm916, %v1479, %v1480
        %v1482 = vrot.slane %v1383, 1
        %v1483 = vsel %vm916, %v1480, %v1482
        %v1484 = vrot.slane %v1384, 1
        %v1485 = vrot.slane %v1385, 1
        %v1486 = vsel %vm916, %v1484, %v1485
        %v1487 = vrot.slane %v1386, 1
        %v1488 = vsel %vm916, %v1485, %v1487
        %v1489 = vrot.slane %v1387, 1
        %v1490 = vrot.slane %v1388, 1
        %v1491 = vsel %vm916, %v1489, %v1490
        %v1492 = vrot.slane %v1389, 1
        %v1493 = vsel %vm916, %v1490, %v1492
        %v1494 = vrot.slane %v1390, 1
        %v1495 = vrot.slane %v1391, 1
        %v1496 = vsel %vm916, %v1494, %v1495
        %v1497 = vrot.slane %v1392, 1
        %v1498 = vsel %vm916, %v1495, %v1497
        %v1499 = vrot.slane %v1393, 1
        %v1500 = vrot.slane %v1394, 1
        %v1501 = vsel %vm916, %v1499, %v1500
        %v1502 = vrot.slane %v1395, 1
        %v1503 = vsel %vm916, %v1500, %v1502
        %v1504 = vrot.slane %v1396, 1
        %v1505 = vrot.slane %v1397, 1
        %v1506 = vsel %vm916, %v1504, %v1505
        %v1507 = vrot.slane %v1398, 1
        %v1508 = vsel %vm916, %v1505, %v1507
        %v1509 = vrot.slane %v1399, 1
        %v1510 = vrot.slane %v1400, 1
        %v1511 = vsel %vm916, %v1509, %v1510
        %v1512 = vrot.slane %v1401, 1
        %v1513 = vsel %vm916, %v1510, %v1512
        %v1514 = vrot.slane %v1402, 1
        %v1515 = vrot.slane %v1403, 1
        %v1516 = vsel %vm916, %v1514, %v1515
        %v1517 = vrot.slane %v1404, 1
        %v1518 = vsel %vm916, %v1515, %v1517
        %v1519 = vrot.slane %v1405, 1
        %v1520 = vrot.slane %v1406, 1
        %v1521 = vsel %vm916, %v1519, %v1520
        %v1522 = vrot.slane %v1407, 1
        %v1523 = vsel %vm916, %v1520, %v1522
        %v1524 = vrot.slane %v1408, 1
        %v1525 = vrot.slane %v1409, 1
        %v1526 = vsel %vm916, %v1524, %v1525
        %v1527 = vrot.slane %v1410, 1
        %v1528 = vsel %vm916, %v1525, %v1527
        %v1529 = vrot.slane %v1411, 1
        %v1530 = vrot.slane %v1412, 1
        %v1531 = vsel %vm916, %v1529, %v1530
        %v1532 = vrot.slane %v1413, 1
        %v1533 = vsel %vm916, %v1530, %v1532
        %v1534 = vrot.slane %v1414, 1
        %v1535 = vrot.slane %v1415, 1
        %v1536 = vsel %vm916, %v1534, %v1535
        %v1537 = vrot.slane %v1416, 1
        %v1538 = vsel %vm916, %v1535, %v1537
        %v1539 = vrot.slane %v1417, 1
        %v1540 = vrot.slane %v1418, 1
        %v1541 = vsel %vm916, %v1539, %v1540
        %v1542 = vrot.slane %v1419, 1
        %v1543 = vsel %vm916, %v1540, %v1542
        %v1544 = vrot.slane %v1420, 1
        %v1545 = vrot.slane %v1421, 1
        %v1546 = vsel %vm916, %v1544, %v1545
        %v1547 = vrot.slane %v1422, 1
        %v1548 = vsel %vm916, %v1545, %v1547
        %v1549 = vrot.slane %v1423, 1
        %v1550 = vrot.slane %v1424, 1
        %v1551 = vsel %vm916, %v1549, %v1550
        %v1552 = vrot.slane %v1425, 1
        %v1553 = vsel %vm916, %v1550, %v1552
        %v1586 = vadd.f32 %v1342, %v1476
        %v1587 = vadd.f32 %v1343, %v1478
        %v1588 = vadd.f32 %v1344, %v1481
        %v1589 = vadd.f32 %v1345, %v1483
        %v1590 = vadd.f32 %v1346, %v1486
        %v1591 = vadd.f32 %v1347, %v1488
        %v1592 = vadd.f32 %v1348, %v1491
        %v1593 = vadd.f32 %v1349, %v1493
        %v1594 = vadd.f32 %v1350, %v1496
        %v1595 = vadd.f32 %v1351, %v1498
        %v1596 = vadd.f32 %v1352, %v1501
        %v1597 = vadd.f32 %v1353, %v1503
        %v1598 = vadd.f32 %v1354, %v1506
        %v1599 = vadd.f32 %v1355, %v1508
        %v1600 = vadd.f32 %v1356, %v1511
        %v1601 = vadd.f32 %v1357, %v1513
        %v1602 = vadd.f32 %v1358, %v1516
        %v1603 = vadd.f32 %v1359, %v1518
        %v1604 = vadd.f32 %v1360, %v1521
        %v1605 = vadd.f32 %v1361, %v1523
        %v1606 = vadd.f32 %v1362, %v1526
        %v1607 = vadd.f32 %v1363, %v1528
        %v1608 = vadd.f32 %v1364, %v1531
        %v1609 = vadd.f32 %v1365, %v1533
        %v1610 = vadd.f32 %v1366, %v1536
        %v1611 = vadd.f32 %v1367, %v1538
        %v1612 = vadd.f32 %v1368, %v1541
        %v1613 = vadd.f32 %v1369, %v1543
        %v1614 = vadd.f32 %v1370, %v1546
        %v1615 = vadd.f32 %v1371, %v1548
        %v1616 = vadd.f32 %v1372, %v1551
        %v1617 = vadd.f32 %v1373, %v1553
        %v1618 = vlaneseq
        %v1619 = vshrl.u32 %v1618, 7
        %v1620 = vsub.s32 5, %v1619
        %v1621 = vrot.slane %v778, %v1620
        %v1622 = vmul.f32 %v727, %v1621
        %v1623 = vmul.f32 %v728, %v1621
        %v1624 = vmul.f32 %v729, %v1621
        %v1625 = vmul.f32 %v730, %v1621
        %v1626 = vmul.f32 %v731, %v1621
        %v1627 = vmul.f32 %v732, %v1621
        %v1628 = vmul.f32 %v733, %v1621
        %v1629 = vmul.f32 %v734, %v1621
        %v1630 = vmul.f32 %v735, %v1621
        %v1631 = vmul.f32 %v736, %v1621
        %v1632 = vmul.f32 %v737, %v1621
        %v1633 = vmul.f32 %v738, %v1621
        %v1634 = vmul.f32 %v739, %v1621
        %v1635 = vmul.f32 %v740, %v1621
        %v1636 = vmul.f32 %v741, %v1621
        %v1637 = vmul.f32 %v742, %v1621
        %v1638 = vmul.f32 %v743, %v1621
        %v1639 = vmul.f32 %v744, %v1621
        %v1640 = vmul.f32 %v745, %v1621
        %v1641 = vmul.f32 %v746, %v1621
        %v1642 = vmul.f32 %v747, %v1621
        %v1643 = vmul.f32 %v748, %v1621
        %v1644 = vmul.f32 %v749, %v1621
        %v1645 = vmul.f32 %v750, %v1621
        %v1646 = vmul.f32 %v751, %v1621
        %v1647 = vmul.f32 %v752, %v1621
        %v1648 = vmul.f32 %v753, %v1621
        %v1649 = vmul.f32 %v754, %v1621
        %v1650 = vmul.f32 %v755, %v1621
        %v1651 = vmul.f32 %v756, %v1621
        %v1652 = vmul.f32 %v757, %v1621
        %v1653 = vmul.f32 %v758, %v1621
        %v1654 = vmul.f32 %v759, %v1621
        %v1655 = vmul.f32 %v760, %v1621
        %v1656 = vmul.f32 %v761, %v1621
        %v1657 = vmul.f32 %v762, %v1621
        %v1658 = vmul.f32 %v763, %v1621
        %v1659 = vmul.f32 %v764, %v1621
        %v1660 = vmul.f32 %v765, %v1621
        %v1661 = vmul.f32 %v766, %v1621
        %v1662 = vmul.f32 %v767, %v1621
        %v1663 = vmul.f32 %v768, %v1621
        %v1664 = vmul.f32 %v769, %v1621
        %v1665 = vmul.f32 %v770, %v1621
        %v1666 = vmul.f32 %v771, %v1621
        %v1667 = vmul.f32 %v772, %v1621
        %v1668 = vmul.f32 %v773, %v1621
        %v1669 = vmul.f32 %v774, %v1621
        %v1718 = vrot.slane %v1622, 2
        %v1719 = vrot.slane %v1623, 2
        %v1720 = vsel %vm1161, %v1718, %v1719
        %v1721 = vrot.slane %v1624, 2
        %v1722 = vsel %vm1161, %v1719, %v1721
        %v1723 = vrot.slane %v1625, 2
        %v1724 = vrot.slane %v1626, 2
        %v1725 = vsel %vm1161, %v1723, %v1724
        %v1726 = vrot.slane %v1627, 2
        %v1727 = vsel %vm1161, %v1724, %v1726
        %v1728 = vrot.slane %v1628, 2
        %v1729 = vrot.slane %v1629, 2
        %v1730 = vsel %vm1161, %v1728, %v1729
        %v1731 = vrot.slane %v1630, 2
        %v1732 = vsel %vm1161, %v1729, %v1731
        %v1733 = vrot.slane %v1631, 2
        %v1734 = vrot.slane %v1632, 2
        %v1735 = vsel %vm1161, %v1733, %v1734
        %v1736 = vrot.slane %v1633, 2
        %v1737 = vsel %vm1161, %v1734, %v1736
        %v1738 = vrot.slane %v1634, 2
        %v1739 = vrot.slane %v1635, 2
        %v1740 = vsel %vm1161, %v1738, %v1739
        %v1741 = vrot.slane %v1636, 2
        %v1742 = vsel %vm1161, %v1739, %v1741
        %v1743 = vrot.slane %v1637, 2
        %v1744 = vrot.slane %v1638, 2
        %v1745 = vsel %vm1161, %v1743, %v1744
        %v1746 = vrot.slane %v1639, 2
        %v1747 = vsel %vm1161, %v1744, %v1746
        %v1748 = vrot.slane %v1640, 2
        %v1749 = vrot.slane %v1641, 2
        %v1750 = vsel %vm1161, %v1748, %v1749
        %v1751 = vrot.slane %v1642, 2
        %v1752 = vsel %vm1161, %v1749, %v1751
        %v1753 = vrot.slane %v1643, 2
        %v1754 = vrot.slane %v1644, 2
        %v1755 = vsel %vm1161, %v1753, %v1754
        %v1756 = vrot.slane %v1645, 2
        %v1757 = vsel %vm1161, %v1754, %v1756
        %v1758 = vrot.slane %v1646, 2
        %v1759 = vrot.slane %v1647, 2
        %v1760 = vsel %vm1161, %v1758, %v1759
        %v1761 = vrot.slane %v1648, 2
        %v1762 = vsel %vm1161, %v1759, %v1761
        %v1763 = vrot.slane %v1649, 2
        %v1764 = vrot.slane %v1650, 2
        %v1765 = vsel %vm1161, %v1763, %v1764
        %v1766 = vrot.slane %v1651, 2
        %v1767 = vsel %vm1161, %v1764, %v1766
        %v1768 = vrot.slane %v1652, 2
        %v1769 = vrot.slane %v1653, 2
        %v1770 = vsel %vm1161, %v1768, %v1769
        %v1771 = vrot.slane %v1654, 2
        %v1772 = vsel %vm1161, %v1769, %v1771
        %v1773 = vrot.slane %v1655, 2
        %v1774 = vrot.slane %v1656, 2
        %v1775 = vsel %vm1161, %v1773, %v1774
        %v1776 = vrot.slane %v1657, 2
        %v1777 = vsel %vm1161, %v1774, %v1776
        %v1778 = vrot.slane %v1658, 2
        %v1779 = vrot.slane %v1659, 2
        %v1780 = vsel %vm1161, %v1778, %v1779
        %v1781 = vrot.slane %v1660, 2
        %v1782 = vsel %vm1161, %v1779, %v1781
        %v1783 = vrot.slane %v1661, 2
        %v1784 = vrot.slane %v1662, 2
        %v1785 = vsel %vm1161, %v1783, %v1784
        %v1786 = vrot.slane %v1663, 2
        %v1787 = vsel %vm1161, %v1784, %v1786
        %v1788 = vrot.slane %v1664, 2
        %v1789 = vrot.slane %v1665, 2
        %v1790 = vsel %vm1161, %v1788, %v1789
        %v1791 = vrot.slane %v1666, 2
        %v1792 = vsel %vm1161, %v1789, %v1791
        %v1793 = vrot.slane %v1667, 2
        %v1794 = vrot.slane %v1668, 2
        %v1795 = vsel %vm1161, %v1793, %v1794
        %v1796 = vrot.slane %v1669, 2
        %v1797 = vsel %vm1161, %v1794, %v1796
        %v1830 = vadd.f32 %v1586, %v1720
        %v1831 = vadd.f32 %v1587, %v1722
        %v1832 = vadd.f32 %v1588, %v1725
        %v1833 = vadd.f32 %v1589, %v1727
        %v1834 = vadd.f32 %v1590, %v1730
        %v1835 = vadd.f32 %v1591, %v1732
        %v1836 = vadd.f32 %v1592, %v1735
        %v1837 = vadd.f32 %v1593, %v1737
        %v1838 = vadd.f32 %v1594, %v1740
        %v1839 = vadd.f32 %v1595, %v1742
        %v1840 = vadd.f32 %v1596, %v1745
        %v1841 = vadd.f32 %v1597, %v1747
        %v1842 = vadd.f32 %v1598, %v1750
        %v1843 = vadd.f32 %v1599, %v1752
        %v1844 = vadd.f32 %v1600, %v1755
        %v1845 = vadd.f32 %v1601, %v1757
        %v1846 = vadd.f32 %v1602, %v1760
        %v1847 = vadd.f32 %v1603, %v1762
        %v1848 = vadd.f32 %v1604, %v1765
        %v1849 = vadd.f32 %v1605, %v1767
        %v1850 = vadd.f32 %v1606, %v1770
        %v1851 = vadd.f32 %v1607, %v1772
        %v1852 = vadd.f32 %v1608, %v1775
        %v1853 = vadd.f32 %v1609, %v1777
        %v1854 = vadd.f32 %v1610, %v1780
        %v1855 = vadd.f32 %v1611, %v1782
        %v1856 = vadd.f32 %v1612, %v1785
        %v1857 = vadd.f32 %v1613, %v1787
        %v1858 = vadd.f32 %v1614, %v1790
        %v1859 = vadd.f32 %v1615, %v1792
        %v1860 = vadd.f32 %v1616, %v1795
        %v1861 = vadd.f32 %v1617, %v1797
        %v1862 = vlaneseq
        %v1863 = vshrl.u32 %v1862, 7
        %v1864 = vsub.s32 6, %v1863
        %v1865 = vrot.slane %v778, %v1864
        %v1866 = vmul.f32 %v730, %v1865
        %v1867 = vmul.f32 %v731, %v1865
        %v1868 = vmul.f32 %v733, %v1865
        %v1869 = vmul.f32 %v734, %v1865
        %v1870 = vmul.f32 %v736, %v1865
        %v1871 = vmul.f32 %v737, %v1865
        %v1872 = vmul.f32 %v739, %v1865
        %v1873 = vmul.f32 %v740, %v1865
        %v1874 = vmul.f32 %v742, %v1865
        %v1875 = vmul.f32 %v743, %v1865
        %v1876 = vmul.f32 %v745, %v1865
        %v1877 = vmul.f32 %v746, %v1865
        %v1878 = vmul.f32 %v748, %v1865
        %v1879 = vmul.f32 %v749, %v1865
        %v1880 = vmul.f32 %v751, %v1865
        %v1881 = vmul.f32 %v752, %v1865
        %v1882 = vmul.f32 %v754, %v1865
        %v1883 = vmul.f32 %v755, %v1865
        %v1884 = vmul.f32 %v757, %v1865
        %v1885 = vmul.f32 %v758, %v1865
        %v1886 = vmul.f32 %v760, %v1865
        %v1887 = vmul.f32 %v761, %v1865
        %v1888 = vmul.f32 %v763, %v1865
        %v1889 = vmul.f32 %v764, %v1865
        %v1890 = vmul.f32 %v766, %v1865
        %v1891 = vmul.f32 %v767, %v1865
        %v1892 = vmul.f32 %v769, %v1865
        %v1893 = vmul.f32 %v770, %v1865
        %v1894 = vmul.f32 %v772, %v1865
        %v1895 = vmul.f32 %v773, %v1865
        %v1896 = vmul.f32 %v775, %v1865
        %v1897 = vmul.f32 %v776, %v1865
        %v1898 = vadd.f32 %v1830, %v1866
        %v1899 = vadd.f32 %v1831, %v1867
        %v1900 = vadd.f32 %v1832, %v1868
        %v1901 = vadd.f32 %v1833, %v1869
        %v1902 = vadd.f32 %v1834, %v1870
        %v1903 = vadd.f32 %v1835, %v1871
        %v1904 = vadd.f32 %v1836, %v1872
        %v1905 = vadd.f32 %v1837, %v1873
        %v1906 = vadd.f32 %v1838, %v1874
        %v1907 = vadd.f32 %v1839, %v1875
        %v1908 = vadd.f32 %v1840, %v1876
        %v1909 = vadd.f32 %v1841, %v1877
        %v1910 = vadd.f32 %v1842, %v1878
        %v1911 = vadd.f32 %v1843, %v1879
        %v1912 = vadd.f32 %v1844, %v1880
        %v1913 = vadd.f32 %v1845, %v1881
        %v1914 = vadd.f32 %v1846, %v1882
        %v1915 = vadd.f32 %v1847, %v1883
        %v1916 = vadd.f32 %v1848, %v1884
        %v1917 = vadd.f32 %v1849, %v1885
        %v1918 = vadd.f32 %v1850, %v1886
        %v1919 = vadd.f32 %v1851, %v1887
        %v1920 = vadd.f32 %v1852, %v1888
        %v1921 = vadd.f32 %v1853, %v1889
        %v1922 = vadd.f32 %v1854, %v1890
        %v1923 = vadd.f32 %v1855, %v1891
        %v1924 = vadd.f32 %v1856, %v1892
        %v1925 = vadd.f32 %v1857, %v1893
        %v1926 = vadd.f32 %v1858, %v1894
        %v1927 = vadd.f32 %v1859, %v1895
        %v1928 = vadd.f32 %v1860, %v1896
        %v1929 = vadd.f32 %v1861, %v1897
        %v1930 = vlaneseq
        %v1931 = vshrl.u32 %v1930, 7
        %v1932 = vsub.s32 7, %v1931
        %v1933 = vrot.slane %v778, %v1932
        %v1934 = vmul.f32 %v730, %v1933
        %v1935 = vmul.f32 %v731, %v1933
        %v1936 = vmul.f32 %v732, %v1933
        %v1937 = vmul.f32 %v733, %v1933
        %v1938 = vmul.f32 %v734, %v1933
        %v1939 = vmul.f32 %v735, %v1933
        %v1940 = vmul.f32 %v736, %v1933
        %v1941 = vmul.f32 %v737, %v1933
        %v1942 = vmul.f32 %v738, %v1933
        %v1943 = vmul.f32 %v739, %v1933
        %v1944 = vmul.f32 %v740, %v1933
        %v1945 = vmul.f32 %v741, %v1933
        %v1946 = vmul.f32 %v742, %v1933
        %v1947 = vmul.f32 %v743, %v1933
        %v1948 = vmul.f32 %v744, %v1933
        %v1949 = vmul.f32 %v745, %v1933
        %v1950 = vmul.f32 %v746, %v1933
        %v1951 = vmul.f32 %v747, %v1933
        %v1952 = vmul.f32 %v748, %v1933
        %v1953 = vmul.f32 %v749, %v1933
        %v1954 = vmul.f32 %v750, %v1933
        %v1955 = vmul.f32 %v751, %v1933
        %v1956 = vmul.f32 %v752, %v1933
        %v1957 = vmul.f32 %v753, %v1933
        %v1958 = vmul.f32 %v754, %v1933
        %v1959 = vmul.f32 %v755, %v1933
        %v1960 = vmul.f32 %v756, %v1933
        %v1961 = vmul.f32 %v757, %v1933
        %v1962 = vmul.f32 %v758, %v1933
        %v1963 = vmul.f32 %v759, %v1933
        %v1964 = vmul.f32 %v760, %v1933
        %v1965 = vmul.f32 %v761, %v1933
        %v1966 = vmul.f32 %v762, %v1933
        %v1967 = vmul.f32 %v763, %v1933
        %v1968 = vmul.f32 %v764, %v1933
        %v1969 = vmul.f32 %v765, %v1933
        %v1970 = vmul.f32 %v766, %v1933
        %v1971 = vmul.f32 %v767, %v1933
        %v1972 = vmul.f32 %v768, %v1933
        %v1973 = vmul.f32 %v769, %v1933
        %v1974 = vmul.f32 %v770, %v1933
        %v1975 = vmul.f32 %v771, %v1933
        %v1976 = vmul.f32 %v772, %v1933
        %v1977 = vmul.f32 %v773, %v1933
        %v1978 = vmul.f32 %v774, %v1933
        %v1979 = vmul.f32 %v775, %v1933
        %v1980 = vmul.f32 %v776, %v1933
        %v1981 = vmul.f32 %v777, %v1933
        %v2030 = vrot.slane %v1934, 1
        %v2031 = vrot.slane %v1935, 1
        %v2032 = vsel %vm916, %v2030, %v2031
        %v2033 = vrot.slane %v1936, 1
        %v2034 = vsel %vm916, %v2031, %v2033
        %v2035 = vrot.slane %v1937, 1
        %v2036 = vrot.slane %v1938, 1
        %v2037 = vsel %vm916, %v2035, %v2036
        %v2038 = vrot.slane %v1939, 1
        %v2039 = vsel %vm916, %v2036, %v2038
        %v2040 = vrot.slane %v1940, 1
        %v2041 = vrot.slane %v1941, 1
        %v2042 = vsel %vm916, %v2040, %v2041
        %v2043 = vrot.slane %v1942, 1
        %v2044 = vsel %vm916, %v2041, %v2043
        %v2045 = vrot.slane %v1943, 1
        %v2046 = vrot.slane %v1944, 1
        %v2047 = vsel %vm916, %v2045, %v2046
        %v2048 = vrot.slane %v1945, 1
        %v2049 = vsel %vm916, %v2046, %v2048
        %v2050 = vrot.slane %v1946, 1
        %v2051 = vrot.slane %v1947, 1
        %v2052 = vsel %vm916, %v2050, %v2051
        %v2053 = vrot.slane %v1948, 1
        %v2054 = vsel %vm916, %v2051, %v2053
        %v2055 = vrot.slane %v1949, 1
        %v2056 = vrot.slane %v1950, 1
        %v2057 = vsel %vm916, %v2055, %v2056
        %v2058 = vrot.slane %v1951, 1
        %v2059 = vsel %vm916, %v2056, %v2058
        %v2060 = vrot.slane %v1952, 1
        %v2061 = vrot.slane %v1953, 1
        %v2062 = vsel %vm916, %v2060, %v2061
        %v2063 = vrot.slane %v1954, 1
        %v2064 = vsel %vm916, %v2061, %v2063
        %v2065 = vrot.slane %v1955, 1
        %v2066 = vrot.slane %v1956, 1
        %v2067 = vsel %vm916, %v2065, %v2066
        %v2068 = vrot.slane %v1957, 1
        %v2069 = vsel %vm916, %v2066, %v2068
        %v2070 = vrot.slane %v1958, 1
        %v2071 = vrot.slane %v1959, 1
        %v2072 = vsel %vm916, %v2070, %v2071
        %v2073 = vrot.slane %v1960, 1
        %v2074 = vsel %vm916, %v2071, %v2073
        %v2075 = vrot.slane %v1961, 1
        %v2076 = vrot.slane %v1962, 1
        %v2077 = vsel %vm916, %v2075, %v2076
        %v2078 = vrot.slane %v1963, 1
        %v2079 = vsel %vm916, %v2076, %v2078
        %v2080 = vrot.slane %v1964, 1
        %v2081 = vrot.slane %v1965, 1
        %v2082 = vsel %vm916, %v2080, %v2081
        %v2083 = vrot.slane %v1966, 1
        %v2084 = vsel %vm916, %v2081, %v2083
        %v2085 = vrot.slane %v1967, 1
        %v2086 = vrot.slane %v1968, 1
        %v2087 = vsel %vm916, %v2085, %v2086
        %v2088 = vrot.slane %v1969, 1
        %v2089 = vsel %vm916, %v2086, %v2088
        %v2090 = vrot.slane %v1970, 1
        %v2091 = vrot.slane %v1971, 1
        %v2092 = vsel %vm916, %v2090, %v2091
        %v2093 = vrot.slane %v1972, 1
        %v2094 = vsel %vm916, %v2091, %v2093
        %v2095 = vrot.slane %v1973, 1
        %v2096 = vrot.slane %v1974, 1
        %v2097 = vsel %vm916, %v2095, %v2096
        %v2098 = vrot.slane %v1975, 1
        %v2099 = vsel %vm916, %v2096, %v2098
        %v2100 = vrot.slane %v1976, 1
        %v2101 = vrot.slane %v1977, 1
        %v2102 = vsel %vm916, %v2100, %v2101
        %v2103 = vrot.slane %v1978, 1
        %v2104 = vsel %vm916, %v2101, %v2103
        %v2105 = vrot.slane %v1979, 1
        %v2106 = vrot.slane %v1980, 1
        %v2107 = vsel %vm916, %v2105, %v2106
        %v2108 = vrot.slane %v1981, 1
        %v2109 = vsel %vm916, %v2106, %v2108
        %v2142 = vadd.f32 %v1898, %v2032
        %v2143 = vadd.f32 %v1899, %v2034
        %v2144 = vadd.f32 %v1900, %v2037
        %v2145 = vadd.f32 %v1901, %v2039
        %v2146 = vadd.f32 %v1902, %v2042
        %v2147 = vadd.f32 %v1903, %v2044
        %v2148 = vadd.f32 %v1904, %v2047
        %v2149 = vadd.f32 %v1905, %v2049
        %v2150 = vadd.f32 %v1906, %v2052
        %v2151 = vadd.f32 %v1907, %v2054
        %v2152 = vadd.f32 %v1908, %v2057
        %v2153 = vadd.f32 %v1909, %v2059
        %v2154 = vadd.f32 %v1910, %v2062
        %v2155 = vadd.f32 %v1911, %v2064
        %v2156 = vadd.f32 %v1912, %v2067
        %v2157 = vadd.f32 %v1913, %v2069
        %v2158 = vadd.f32 %v1914, %v2072
        %v2159 = vadd.f32 %v1915, %v2074
        %v2160 = vadd.f32 %v1916, %v2077
        %v2161 = vadd.f32 %v1917, %v2079
        %v2162 = vadd.f32 %v1918, %v2082
        %v2163 = vadd.f32 %v1919, %v2084
        %v2164 = vadd.f32 %v1920, %v2087
        %v2165 = vadd.f32 %v1921, %v2089
        %v2166 = vadd.f32 %v1922, %v2092
        %v2167 = vadd.f32 %v1923, %v2094
        %v2168 = vadd.f32 %v1924, %v2097
        %v2169 = vadd.f32 %v1925, %v2099
        %v2170 = vadd.f32 %v1926, %v2102
        %v2171 = vadd.f32 %v1927, %v2104
        %v2172 = vadd.f32 %v1928, %v2107
        %v2173 = vadd.f32 %v1929, %v2109
        %v2174 = vlaneseq
        %v2175 = vshrl.u32 %v2174, 7
        %v2176 = vsub.s32 0, %v2175
        %v2177 = vrot.slane %v779, %v2176
        %v2178 = vmul.f32 %v730, %v2177
        %v2179 = vmul.f32 %v731, %v2177
        %v2180 = vmul.f32 %v732, %v2177
        %v2181 = vmul.f32 %v733, %v2177
        %v2182 = vmul.f32 %v734, %v2177
        %v2183 = vmul.f32 %v735, %v2177
        %v2184 = vmul.f32 %v736, %v2177
        %v2185 = vmul.f32 %v737, %v2177
        %v2186 = vmul.f32 %v738, %v2177
        %v2187 = vmul.f32 %v739, %v2177
        %v2188 = vmul.f32 %v740, %v2177
        %v2189 = vmul.f32 %v741, %v2177
        %v2190 = vmul.f32 %v742, %v2177
        %v2191 = vmul.f32 %v743, %v2177
        %v2192 = vmul.f32 %v744, %v2177
        %v2193 = vmul.f32 %v745, %v2177
        %v2194 = vmul.f32 %v746, %v2177
        %v2195 = vmul.f32 %v747, %v2177
        %v2196 = vmul.f32 %v748, %v2177
        %v2197 = vmul.f32 %v749, %v2177
        %v2198 = vmul.f32 %v750, %v2177
        %v2199 = vmul.f32 %v751, %v2177
        %v2200 = vmul.f32 %v752, %v2177
        %v2201 = vmul.f32 %v753, %v2177
        %v2202 = vmul.f32 %v754, %v2177
        %v2203 = vmul.f32 %v755, %v2177
        %v2204 = vmul.f32 %v756, %v2177
        %v2205 = vmul.f32 %v757, %v2177
        %v2206 = vmul.f32 %v758, %v2177
        %v2207 = vmul.f32 %v759, %v2177
        %v2208 = vmul.f32 %v760, %v2177
        %v2209 = vmul.f32 %v761, %v2177
        %v2210 = vmul.f32 %v762, %v2177
        %v2211 = vmul.f32 %v763, %v2177
        %v2212 = vmul.f32 %v764, %v2177
        %v2213 = vmul.f32 %v765, %v2177
        %v2214 = vmul.f32 %v766, %v2177
        %v2215 = vmul.f32 %v767, %v2177
        %v2216 = vmul.f32 %v768, %v2177
        %v2217 = vmul.f32 %v769, %v2177
        %v2218 = vmul.f32 %v770, %v2177
        %v2219 = vmul.f32 %v771, %v2177
        %v2220 = vmul.f32 %v772, %v2177
        %v2221 = vmul.f32 %v773, %v2177
        %v2222 = vmul.f32 %v774, %v2177
        %v2223 = vmul.f32 %v775, %v2177
        %v2224 = vmul.f32 %v776, %v2177
        %v2225 = vmul.f32 %v777, %v2177
        %v2274 = vrot.slane %v2178, 2
        %v2275 = vrot.slane %v2179, 2
        %v2276 = vsel %vm1161, %v2274, %v2275
        %v2277 = vrot.slane %v2180, 2
        %v2278 = vsel %vm1161, %v2275, %v2277
        %v2279 = vrot.slane %v2181, 2
        %v2280 = vrot.slane %v2182, 2
        %v2281 = vsel %vm1161, %v2279, %v2280
        %v2282 = vrot.slane %v2183, 2
        %v2283 = vsel %vm1161, %v2280, %v2282
        %v2284 = vrot.slane %v2184, 2
        %v2285 = vrot.slane %v2185, 2
        %v2286 = vsel %vm1161, %v2284, %v2285
        %v2287 = vrot.slane %v2186, 2
        %v2288 = vsel %vm1161, %v2285, %v2287
        %v2289 = vrot.slane %v2187, 2
        %v2290 = vrot.slane %v2188, 2
        %v2291 = vsel %vm1161, %v2289, %v2290
        %v2292 = vrot.slane %v2189, 2
        %v2293 = vsel %vm1161, %v2290, %v2292
        %v2294 = vrot.slane %v2190, 2
        %v2295 = vrot.slane %v2191, 2
        %v2296 = vsel %vm1161, %v2294, %v2295
        %v2297 = vrot.slane %v2192, 2
        %v2298 = vsel %vm1161, %v2295, %v2297
        %v2299 = vrot.slane %v2193, 2
        %v2300 = vrot.slane %v2194, 2
        %v2301 = vsel %vm1161, %v2299, %v2300
        %v2302 = vrot.slane %v2195, 2
        %v2303 = vsel %vm1161, %v2300, %v2302
        %v2304 = vrot.slane %v2196, 2
        %v2305 = vrot.slane %v2197, 2
        %v2306 = vsel %vm1161, %v2304, %v2305
        %v2307 = vrot.slane %v2198, 2
        %v2308 = vsel %vm1161, %v2305, %v2307
        %v2309 = vrot.slane %v2199, 2
        %v2310 = vrot.slane %v2200, 2
        %v2311 = vsel %vm1161, %v2309, %v2310
        %v2312 = vrot.slane %v2201, 2
        %v2313 = vsel %vm1161, %v2310, %v2312
        %v2314 = vrot.slane %v2202, 2
        %v2315 = vrot.slane %v2203, 2
        %v2316 = vsel %vm1161, %v2314, %v2315
        %v2317 = vrot.slane %v2204, 2
        %v2318 = vsel %vm1161, %v2315, %v2317
        %v2319 = vrot.slane %v2205, 2
        %v2320 = vrot.slane %v2206, 2
        %v2321 = vsel %vm1161, %v2319, %v2320
        %v2322 = vrot.slane %v2207, 2
        %v2323 = vsel %vm1161, %v2320, %v2322
        %v2324 = vrot.slane %v2208, 2
        %v2325 = vrot.slane %v2209, 2
        %v2326 = vsel %vm1161, %v2324, %v2325
        %v2327 = vrot.slane %v2210, 2
        %v2328 = vsel %vm1161, %v2325, %v2327
        %v2329 = vrot.slane %v2211, 2
        %v2330 = vrot.slane %v2212, 2
        %v2331 = vsel %vm1161, %v2329, %v2330
        %v2332 = vrot.slane %v2213, 2
        %v2333 = vsel %vm1161, %v2330, %v2332
        %v2334 = vrot.slane %v2214, 2
        %v2335 = vrot.slane %v2215, 2
        %v2336 = vsel %vm1161, %v2334, %v2335
        %v2337 = vrot.slane %v2216, 2
        %v2338 = vsel %vm1161, %v2335, %v2337
        %v2339 = vrot.slane %v2217, 2
        %v2340 = vrot.slane %v2218, 2
        %v2341 = vsel %vm1161, %v2339, %v2340
        %v2342 = vrot.slane %v2219, 2
        %v2343 = vsel %vm1161, %v2340, %v2342
        %v2344 = vrot.slane %v2220, 2
        %v2345 = vrot.slane %v2221, 2
        %v2346 = vsel %vm1161, %v2344, %v2345
        %v2347 = vrot.slane %v2222, 2
        %v2348 = vsel %vm1161, %v2345, %v2347
        %v2349 = vrot.slane %v2223, 2
        %v2350 = vrot.slane %v2224, 2
        %v2351 = vsel %vm1161, %v2349, %v2350
        %v2352 = vrot.slane %v2225, 2
        %v2353 = vsel %vm1161, %v2350, %v2352
        %v2386 = vadd.f32 %v2142, %v2276
        %v2387 = vadd.f32 %v2143, %v2278
        %v2388 = vadd.f32 %v2144, %v2281
        %v2389 = vadd.f32 %v2145, %v2283
        %v2390 = vadd.f32 %v2146, %v2286
        %v2391 = vadd.f32 %v2147, %v2288
        %v2392 = vadd.f32 %v2148, %v2291
        %v2393 = vadd.f32 %v2149, %v2293
        %v2394 = vadd.f32 %v2150, %v2296
        %v2395 = vadd.f32 %v2151, %v2298
        %v2396 = vadd.f32 %v2152, %v2301
        %v2397 = vadd.f32 %v2153, %v2303
        %v2398 = vadd.f32 %v2154, %v2306
        %v2399 = vadd.f32 %v2155, %v2308
        %v2400 = vadd.f32 %v2156, %v2311
        %v2401 = vadd.f32 %v2157, %v2313
        %v2402 = vadd.f32 %v2158, %v2316
        %v2403 = vadd.f32 %v2159, %v2318
        %v2404 = vadd.f32 %v2160, %v2321
        %v2405 = vadd.f32 %v2161, %v2323
        %v2406 = vadd.f32 %v2162, %v2326
        %v2407 = vadd.f32 %v2163, %v2328
        %v2408 = vadd.f32 %v2164, %v2331
        %v2409 = vadd.f32 %v2165, %v2333
        %v2410 = vadd.f32 %v2166, %v2336
        %v2411 = vadd.f32 %v2167, %v2338
        %v2412 = vadd.f32 %v2168, %v2341
        %v2413 = vadd.f32 %v2169, %v2343
        %v2414 = vadd.f32 %v2170, %v2346
        %v2415 = vadd.f32 %v2171, %v2348
        %v2416 = vadd.f32 %v2172, %v2351
        %v2417 = vadd.f32 %v2173, %v2353
        %v2418 = vld [vmem:[%s4] sm:$0x1]
        %v2420 = vlaneseq
        %v2421 = vshrl.u32 %v2420, 7
        %v2422 = vsub.s32 0, %v2421
        %v2423 = vrot.slane %v2418, %v2422
        %v2425 = vadd.f32 %v2386, %v2423
        %v2426 = vadd.f32 %v2387, %v2423
        %v2427 = vadd.f32 %v2388, %v2423
        %v2428 = vadd.f32 %v2389, %v2423
        %v2429 = vadd.f32 %v2390, %v2423
        %v2430 = vadd.f32 %v2391, %v2423
        %v2431 = vadd.f32 %v2392, %v2423
        %v2432 = vadd.f32 %v2393, %v2423
        %v2433 = vadd.f32 %v2394, %v2423
        %v2434 = vadd.f32 %v2395, %v2423
        %v2435 = vadd.f32 %v2396, %v2423
        %v2436 = vadd.f32 %v2397, %v2423
        %v2437 = vadd.f32 %v2398, %v2423
        %v2438 = vadd.f32 %v2399, %v2423
        %v2439 = vadd.f32 %v2400, %v2423
        %v2440 = vadd.f32 %v2401, %v2423
        %v2441 = vadd.f32 %v2402, %v2423
        %v2442 = vadd.f32 %v2403, %v2423
        %v2443 = vadd.f32 %v2404, %v2423
        %v2444 = vadd.f32 %v2405, %v2423
        %v2445 = vadd.f32 %v2406, %v2423
        %v2446 = vadd.f32 %v2407, %v2423
        %v2447 = vadd.f32 %v2408, %v2423
        %v2448 = vadd.f32 %v2409, %v2423
        %v2449 = vadd.f32 %v2410, %v2423
        %v2450 = vadd.f32 %v2411, %v2423
        %v2451 = vadd.f32 %v2412, %v2423
        %v2452 = vadd.f32 %v2413, %v2423
        %v2453 = vadd.f32 %v2414, %v2423
        %v2454 = vadd.f32 %v2415, %v2423
        %v2455 = vadd.f32 %v2416, %v2423
        %v2456 = vadd.f32 %v2417, %v2423
        %v2457 = vmax.f32 %v2425, 0.0
        %v2458 = vmax.f32 %v2426, 0.0
        %v2459 = vmax.f32 %v2427, 0.0
        %v2460 = vmax.f32 %v2428, 0.0
        %v2461 = vmax.f32 %v2429, 0.0
        %v2462 = vmax.f32 %v2430, 0.0
        %v2463 = vmax.f32 %v2431, 0.0
        %v2464 = vmax.f32 %v2432, 0.0
        %v2465 = vmax.f32 %v2433, 0.0
        %v2466 = vmax.f32 %v2434, 0.0
        %v2467 = vmax.f32 %v2435, 0.0
        %v2468 = vmax.f32 %v2436, 0.0
        %v2469 = vmax.f32 %v2437, 0.0
        %v2470 = vmax.f32 %v2438, 0.0
        %v2471 = vmax.f32 %v2439, 0.0
        %v2472 = vmax.f32 %v2440, 0.0
        %v2473 = vmax.f32 %v2441, 0.0
        %v2474 = vmax.f32 %v2442, 0.0
        %v2475 = vmax.f32 %v2443, 0.0
        %v2476 = vmax.f32 %v2444, 0.0
        %v2477 = vmax.f32 %v2445, 0.0
        %v2478 = vmax.f32 %v2446, 0.0
        %v2479 = vmax.f32 %v2447, 0.0
        %v2480 = vmax.f32 %v2448, 0.0
        %v2481 = vmax.f32 %v2449, 0.0
        %v2482 = vmax.f32 %v2450, 0.0
        %v2483 = vmax.f32 %v2451, 0.0
        %v2484 = vmax.f32 %v2452, 0.0
        %v2485 = vmax.f32 %v2453, 0.0
        %v2486 = vmax.f32 %v2454, 0.0
        %v2487 = vmax.f32 %v2455, 0.0
        %v2488 = vmax.f32 %v2456, 0.0
        %v2489 = vmin.f32 %v2457, 6.0
        %v2490 = vmin.f32 %v2458, 6.0
        %v2491 = vmin.f32 %v2459, 6.0
        %v2492 = vmin.f32 %v2460, 6.0
        %v2493 = vmin.f32 %v2461, 6.0
        %v2494 = vmin.f32 %v2462, 6.0
        %v2495 = vmin.f32 %v2463, 6.0
        %v2496 = vmin.f32 %v2464, 6.0
        %v2497 = vmin.f32 %v2465, 6.0
        %v2498 = vmin.f32 %v2466, 6.0
        %v2499 = vmin.f32 %v2467, 6.0
        %v2500 = vmin.f32 %v2468, 6.0
        %v2501 = vmin.f32 %v2469, 6.0
        %v2502 = vmin.f32 %v2470, 6.0
        %v2503 = vmin.f32 %v2471, 6.0
        %v2504 = vmin.f32 %v2472, 6.0
        %v2505 = vmin.f32 %v2473, 6.0
        %v2506 = vmin.f32 %v2474, 6.0
        %v2507 = vmin.f32 %v2475, 6.0
        %v2508 = vmin.f32 %v2476, 6.0
        %v2509 = vmin.f32 %v2477, 6.0
        %v2510 = vmin.f32 %v2478, 6.0
        %v2511 = vmin.f32 %v2479, 6.0
        %v2512 = vmin.f32 %v2480, 6.0
        %v2513 = vmin.f32 %v2481, 6.0
        %v2514 = vmin.f32 %v2482, 6.0
        %v2515 = vmin.f32 %v2483, 6.0
        %v2516 = vmin.f32 %v2484, 6.0
        %v2517 = vmin.f32 %v2485, 6.0
        %v2518 = vmin.f32 %v2486, 6.0
        %v2519 = vmin.f32 %v2487, 6.0
        %v2520 = vmin.f32 %v2488, 6.0
        %v2521 = vpack.c.bf16 %v2490, %v2489
        %v2522 = vpack.c.bf16 %v2492, %v2491
        %v2523 = vpack.c.bf16 %v2494, %v2493
        %v2524 = vpack.c.bf16 %v2496, %v2495
        %v2525 = vpack.c.bf16 %v2498, %v2497
        %v2526 = vpack.c.bf16 %v2500, %v2499
        %v2527 = vpack.c.bf16 %v2502, %v2501
        %v2528 = vpack.c.bf16 %v2504, %v2503
        %v2529 = vpack.c.bf16 %v2506, %v2505
        %v2530 = vpack.c.bf16 %v2508, %v2507
        %v2531 = vpack.c.bf16 %v2510, %v2509
        %v2532 = vpack.c.bf16 %v2512, %v2511
        %v2533 = vpack.c.bf16 %v2514, %v2513
        %v2534 = vpack.c.bf16 %v2516, %v2515
        %v2535 = vpack.c.bf16 %v2518, %v2517
        %v2536 = vpack.c.bf16 %v2520, %v2519
        %v2537 = vld [vmem:[%s5] sm:$0x3]
        %v2538 = vld [vmem:[%s6] sm:$0xf]
        %2540 = vset.pattern.permute.xlu0 0
        %2541 = vperm.xlu0 %2540, %v2538
        %v2542 = vpop.permute.xlu0 %2541
        %v2545 = vsel %vm635, %v2537, 0
        %v2548 = vsel %vm635, %v2521, 0
        %v2551 = vsel %vm635, %v2522, 0
        %v2554 = vsel %vm635, %v2523, 0
        %v2557 = vsel %vm635, %v2524, 0
        %v2560 = vsel %vm635, %v2525, 0
        %v2563 = vsel %vm635, %v2526, 0
        %v2566 = vsel %vm635, %v2527, 0
        %v2569 = vsel %vm635, %v2528, 0
        %v2572 = vsel %vm635, %v2529, 0
        %v2575 = vsel %vm635, %v2530, 0
        %v2578 = vsel %vm635, %v2531, 0
        %v2581 = vsel %vm635, %v2532, 0
        %v2584 = vsel %vm635, %v2533, 0
        %v2587 = vsel %vm635, %v2534, 0
        %v2590 = vsel %vm635, %v2535, 0
        %v2593 = vsel %vm635, %v2536, 0
        %2595 = vmatprep.subr.bf16.mxu0 0
        %2596 = vmatpush1.bf16.xpose.msra.mxu0 %v2569
        %2597 = vmatprep.subr.bf16.mxu0 0
        %2598 = vmatpush1.bf16.xpose.msra.mxu0 %v2566
        %2599 = vmatprep.subr.bf16.mxu0 0
        %2600 = vmatpush1.bf16.xpose.msra.mxu0 %v2563
        %2601 = vmatprep.subr.bf16.mxu0 0
        %2602 = vmatpush1.bf16.xpose.msra.mxu0 %v2560
        %2603 = vmatprep.subr.bf16.mxu0 0
        %2604 = vmatpush1.bf16.xpose.msra.mxu0 %v2557
        %2605 = vmatprep.subr.bf16.mxu0 0
        %2606 = vmatpush1.bf16.xpose.msra.mxu0 %v2554
        %2607 = vmatprep.subr.bf16.mxu0 0
        %2608 = vmatpush1.bf16.xpose.msra.mxu0 %v2551
        %2609 = vmatprep.subr.bf16.mxu0 0
        %2610 = vmatpush1.bf16.xpose.msra.mxu0 %v2548
        %2611 = vmatprep.subr.bf16.mxu0 0
        %2612 = vmatpush2.bf16.xpose.msra.mxu0 %v2593
        %2613 = vmatprep.subr.bf16.mxu0 0
        %2614 = vmatpush2.bf16.xpose.msra.mxu0 %v2590
        %2615 = vmatprep.subr.bf16.mxu0 0
        %2616 = vmatpush2.bf16.xpose.msra.mxu0 %v2587
        %2617 = vmatprep.subr.bf16.mxu0 0
        %2618 = vmatpush2.bf16.xpose.msra.mxu0 %v2584
        %2619 = vmatprep.subr.bf16.mxu0 0
        %2620 = vmatpush2.bf16.xpose.msra.mxu0 %v2581
        %2621 = vmatprep.subr.bf16.mxu0 0
        %2622 = vmatpush2.bf16.xpose.msra.mxu0 %v2578
        %2623 = vmatprep.subr.bf16.mxu0 0
        %2624 = vmatpush2.bf16.xpose.msra.mxu0 %v2575
        %2625 = vmatprep.subr.bf16.mxu0 0
        %2626 = vmatpush2.bf16.xpose.msra.mxu0 %v2572
        %2627 = vmatprep.mubr.bf16.mxu0 0
        %2628 = vmatmul.mubr.bf16.gmra.mxu0 %v2545
        %v2629 = vpop.f32.mrf.mxu0
        %v2630 = vadd.f32 %v2542, %v2629
        %v2631 = vpop.f32.mrf.mxu0
        %v2632 = vadd.f32 %v2542, %v2631
        %v2633 = vpop.f32.mrf.mxu0
        %v2634 = vpop.f32.mrf.mxu0
        %2635 = vdwg.mxu0
        %v2636 = vadd.f32 %v2630, %v311
        %v2637 = vadd.f32 %v2632, %v313
        %v2640 = vcombine.low %v2636, %v2637
        %2642 = vst [vmem:[%s309] sm:$0xff] %v2640
        %s2643 = sand.u32 %s185, 1
        %s2644 = scalar_lea.sflag [#allocation5], %s2643
        %s2645 = sand.u32 %s185, 1
        %s2646 = smul.addr %s2645, 8
        %s2647 = scalar_lea.vmem [#allocation8], %s2646
        // Predicated region
        $region57: #{tpu_custom_call.1} parent=47 // pred_check
          %p2648 = pneg %p195
        $region58: #{tpu_custom_call.1} parent=47 // pred_check_branch
          %2650 = sbr.rel (%p2648) target = $region60
        $region59: #{tpu_custom_call.1} parent=47 // pred_region
          %s2652 = ssub.s32 128, 128
          %2653 = vsyncadd %s2644, %s2652
          %s2654 = smul.addr %s25, 2
          %s2655 = smul.addr %s2654, 64
          %s2656 = scalar_lea.hbm %s7, %s2655
          %s2658 = sshll.u32 %s2647, 4
          %s2659 = int_to_ptr.vmem [resolvable:$true] %s2658
          %2661 = dma.vmem_to_hbm [thread:$0]  %s2659, 128, %s2656, %s2644
        $region60: #{tpu_custom_call.1} parent=47 // pred_fallthru
          _
      $region48: #{tpu_custom_call.1} parent=5 // pred_fallthru
        _
      %p2662 = scmp.le.s32.totalorder 2, %s20
      // Predicated region
      $region61: #{tpu_custom_call.1} parent=5 // pred_check
        %p2663 = pneg %p2662
      $region62: #{tpu_custom_call.1} parent=5 // pred_check_branch
        %2665 = sbr.rel (%p2663) target = $region64
      $region63: #{tpu_custom_call.1} parent=5 // pred_region
        %s2666 = ssub.s32 %s20, 2
        // Predicated region
        $region65: #{tpu_custom_call.1} parent=63 // pred_check
          %p2667 = pneg %p201
        $region66: #{tpu_custom_call.1} parent=63 // pred_check_branch
          %2669 = sbr.rel (%p2667) target = $region68
        $region67: #{tpu_custom_call.1} parent=63 // pred_region
          %s2670 = sand.u32 %s186, 1
          %s2671 = scalar_lea.sflag [#allocation5], %s2670
          %s2672 = sand.u32 %s186, 1
          %s2673 = smul.addr %s2672, 8
          %s2674 = scalar_lea.vmem [#allocation8], %s2673
          %2675 = dma.done %s2671, 128
        $region68: #{tpu_custom_call.1} parent=63 // pred_fallthru
          _
      $region64: #{tpu_custom_call.1} parent=5 // pred_fallthru
        _
    $region6: #{tpu_custom_call.1} parent=1 // loop_footer
      %s24 = sadd.s32 1, %s20
    $region7: #{tpu_custom_call.1} parent=1 // loop_footer_branch
      %19 = sbr.rel target = $region3
    $region8: #{tpu_custom_call.1} parent=1 // loop_exit
      _
    %2676 = vsyncpa [#allocation4], 1
    %s2677 = scalar_lea.sflag [#allocation4], 1
    %2678 = vsyncpa %s2677, 1
    %2679 = vsyncpa [#allocation7], 1
    %2680 = vsyncpa [#allocation5], 1
    %s2681 = scalar_lea.sflag [#allocation5], 1
    %2682 = vsyncpa %s2681, 1

</llo_original>
